<compile_context>
chip_gen: v7x
topology: tpu7x:2x2x1
jax: 0.10.0
libtpu: 0.0.40
codegen_flags: <defaults>
</compile_context>

<pallas_src>
import functools
import math

import jax
import jax.numpy as jnp
from jax.experimental import pallas as pl
from jax.experimental.pallas import tpu as pltpu

_EPS = 1e-5
_VMEM_LIMIT = 32 * 1024 * 1024  # explicit scoped-VMEM budget, safe on v5e/v6e/v7x


# ----------------------------------------------------------------------------
# Shared epilogue: training-mode BatchNorm + scale/bias + residual + ReLU (f32)
# ----------------------------------------------------------------------------
def _epilogue(acc, s, b, r, bn, relu):
    if bn:
        # exact training-mode BatchNorm: biased batch stats over all N*H*W rows
        mean = jnp.mean(acc, axis=0, keepdims=True)
        var = jnp.mean((acc - mean) ** 2, axis=0, keepdims=True)
        acc = (acc - mean) * jax.lax.rsqrt(var + _EPS)
    acc = acc * s + b  # gamma/beta (or 1/bias for the plain-bias conv)
    if r is not None:
        acc = acc + r
    if relu:
        acc = jnp.maximum(acc, 0.0)
    return acc


def _pick_tile(dim, cands):
    for c in cands:
        if dim % c == 0 and dim > c:
            return c
    return dim


# ----------------------------------------------------------------------------
# Pallas kernels
# ----------------------------------------------------------------------------
@functools.lru_cache(maxsize=None)
def _make_slab_kernel(bn, relu, has_res):
    """Tiled matmul: grid = (Cout tiles, K tiles), f32 scratch accumulator."""

    def kernel(x_ref, w_ref, s_ref, b_ref, *rest):
        if has_res:
            r_ref, o_ref, acc_ref = rest
        else:
            o_ref, acc_ref = rest
            r_ref = None
        kk = pl.program_id(1)

        @pl.when(kk == 0)
        def _():
            acc_ref[...] = jnp.zeros_like(acc_ref)

        acc_ref[...] += jnp.dot(x_ref[...], w_ref[...],
                                preferred_element_type=jnp.float32)

        @pl.when(kk == pl.num_programs(1) - 1)
        def _():
            r = r_ref[...] if r_ref is not None else None
            o_ref[...] = _epilogue(acc_ref[...], s_ref[...], b_ref[...],
                                   r, bn, relu)

    return kernel


@functools.lru_cache(maxsize=None)
def _make_tap_kernel(bn, relu, has_res, n, ho, wo, cin, ksize):
    """3x3 / stride-1 conv: patch assembly is done in VMEM (no HBM im2col)."""
    m = n * ho * wo

    def kernel(x_ref, w_ref, s_ref, b_ref, *rest):
        if has_res:
            r_ref, o_ref = rest
        else:
            (o_ref,) = rest
            r_ref = None
        acc = jnp.zeros(o_ref.shape, jnp.float32)
        for dy in range(ksize):
            for dx in range(ksize):
                xs = x_ref[:, pl.ds(dy, ho), pl.ds(dx, wo), :]   # (n, ho, wo, cin)
                xs = xs.reshape(m, cin).astype(jnp.bfloat16)
                acc = acc + jnp.dot(xs, w_ref[dy, dx],
                                    preferred_element_type=jnp.float32)
        r = r_ref[...] if r_ref is not None else None
        o_ref[...] = _epilogue(acc, s_ref[...], b_ref[...], r, bn, relu)

    return kernel


@functools.lru_cache(maxsize=None)
def _make_addn_relu_kernel(n):
    def kernel(*refs):
        o_ref = refs[-1]
        acc = refs[0][...]
        for i in range(1, n):
            acc = acc + refs[i][...]
        o_ref[...] = jnp.maximum(acc, 0.0)
    return kernel


# ----------------------------------------------------------------------------
# Convolution wrappers
# ----------------------------------------------------------------------------
def _im2col(x, k, stride, pad):
    """x: (N, H, W, C) -> (N*Ho*Wo, k*k*C) patches in (dy, dx, c) order."""
    n, h, w, c = x.shape
    if pad:
        x = jnp.pad(x, ((0, 0), (pad, pad), (pad, pad), (0, 0)))
    hp, wp = h + 2 * pad, w + 2 * pad
    ho = (hp - k) // stride + 1
    wo = (wp - k) // stride + 1
    cols = []
    for dy in range(k):
        for dx in range(k):
            cols.append(x[:, dy:dy + stride * (ho - 1) + 1:stride,
                          dx:dx + stride * (wo - 1) + 1:stride, :])
    patches = jnp.concatenate(cols, axis=-1)
    return patches.reshape(n * ho * wo, k * k * c), ho, wo


def _conv_slab(x, w, scale, bias, residual, stride, pad, bn, relu):
    n = x.shape[0]
    k, _, cin, cout = w.shape
    # TODO(synk): the k>1 slab path still materializes a k*k im2col copy in HBM;
    # only the (dominant) 3x3/stride-1 convs use the in-VMEM tap-assembly path.
    patches, ho, wo = _im2col(x.astype(jnp.bfloat16), k, stride, pad)
    m = n * ho * wo
    kdim = k * k * cin
    wmat = w.reshape(kdim, cout).astype(jnp.bfloat16)
    tk = _pick_tile(kdim, (512, 384, 256, 128))
    tn = _pick_tile(cout, (128,))
    grid = (cout // tn, kdim // tk)

    args = [patches, wmat, scale.reshape(1, cout), bias.reshape(1, cout)]
    in_specs = [pl.BlockSpec((m, tk), lambda j, kk: (0, kk)),
                pl.BlockSpec((tk, tn), lambda j, kk: (kk, j)),
                pl.BlockSpec((1, tn), lambda j, kk: (0, j)),
                pl.BlockSpec((1, tn), lambda j, kk: (0, j))]
    has_res = residual is not None
    if has_res:
        args.append(residual.reshape(m, cout))
        in_specs.append(pl.BlockSpec((m, tn), lambda j, kk: (0, j)))

    out = pl.pallas_call(
        _make_slab_kernel(bn, relu, has_res),
        out_shape=jax.ShapeDtypeStruct((m, cout), jnp.float32),
        grid=grid,
        in_specs=in_specs,
        out_specs=pl.BlockSpec((m, tn), lambda j, kk: (0, j)),
        scratch_shapes=[pltpu.VMEM((m, tn), jnp.float32)],
        compiler_params=pltpu.CompilerParams(
            dimension_semantics=("parallel", "arbitrary"),
            vmem_limit_bytes=_VMEM_LIMIT),
    )(*args)
    return out.reshape(n, ho, wo, cout)


def _conv_tap(x, w, scale, bias, residual, bn, relu):
    """3x3, stride 1, pad 1 conv with in-kernel patch assembly."""
    n, h, wd, cin = x.shape
    k, _, _, cout = w.shape
    ho, wo = h, wd
    m = n * ho * wo
    xp = jnp.pad(x, ((0, 0), (1, 1), (1, 1), (0, 0)))     # f32, fetched once
    wq = w.astype(jnp.bfloat16)
    tn = _pick_tile(cout, (128,))
    grid = (cout // tn,)

    args = [xp, wq, scale.reshape(1, cout), bias.reshape(1, cout)]
    in_specs = [pl.BlockSpec((n, h + 2, wd + 2, cin), lambda j: (0, 0, 0, 0)),
                pl.BlockSpec((k, k, cin, tn), lambda j: (0, 0, 0, j)),
                pl.BlockSpec((1, tn), lambda j: (0, j)),
                pl.BlockSpec((1, tn), lambda j: (0, j))]
    has_res = residual is not None
    if has_res:
        args.append(residual.reshape(m, cout))
        in_specs.append(pl.BlockSpec((m, tn), lambda j: (0, j)))

    out = pl.pallas_call(
        _make_tap_kernel(bn, relu, has_res, n, ho, wo, cin, k),
        out_shape=jax.ShapeDtypeStruct((m, cout), jnp.float32),
        grid=grid,
        in_specs=in_specs,
        out_specs=pl.BlockSpec((m, tn), lambda j: (0, j)),
        compiler_params=pltpu.CompilerParams(
            dimension_semantics=("parallel",),
            vmem_limit_bytes=_VMEM_LIMIT),
    )(*args)
    return out.reshape(n, ho, wo, cout)


@functools.partial(jax.jit, static_argnames=("stride", "pad", "bn", "relu"))
def _conv_slab_nores(x, w, scale, bias, *, stride, pad, bn, relu):
    return _conv_slab(x, w, scale, bias, None, stride, pad, bn, relu)


@functools.partial(jax.jit, static_argnames=("stride", "pad", "bn", "relu"))
def _conv_slab_res(x, w, scale, bias, residual, *, stride, pad, bn, relu):
    return _conv_slab(x, w, scale, bias, residual, stride, pad, bn, relu)


@functools.partial(jax.jit, static_argnames=("bn", "relu"))
def _conv_tap_nores(x, w, scale, bias, *, bn, relu):
    return _conv_tap(x, w, scale, bias, None, bn, relu)


@functools.partial(jax.jit, static_argnames=("bn", "relu"))
def _conv_tap_res(x, w, scale, bias, residual, *, bn, relu):
    return _conv_tap(x, w, scale, bias, residual, bn, relu)


_TAP_DISABLED = set()


def conv_bn(x, p, relu=False, residual=None):
    w = p["w"]
    k = w.shape[0]
    stride, pad, bn = p["stride"], p["pad"], p["bn"]
    wo = (x.shape[2] + 2 * pad - k) // stride + 1
    use_tap = (k == 3 and stride == 1 and pad == 1 and wo % 8 == 0)
    sig = (x.shape, w.shape, bn, relu, residual is not None)
    if use_tap and sig not in _TAP_DISABLED:
        try:
            if residual is None:
                return _conv_tap_nores(x, w, p["scale"], p["bias"],
                                       bn=bn, relu=relu)
            return _conv_tap_res(x, w, p["scale"], p["bias"], residual,
                                 bn=bn, relu=relu)
        except Exception:
            # TODO(synk): in-kernel patch assembly failed to lower on this
            # backend/shape; fall back to the HBM-im2col slab path.
            _TAP_DISABLED.add(sig)
    if residual is None:
        return _conv_slab_nores(x, w, p["scale"], p["bias"],
                                stride=stride, pad=pad, bn=bn, relu=relu)
    return _conv_slab_res(x, w, p["scale"], p["bias"], residual,
                          stride=stride, pad=pad, bn=bn, relu=relu)


@jax.jit
def add_n_relu(terms):
    terms = list(terms)
    n, h, w, c = terms[0].shape
    m = n * h * w
    flat = [t.reshape(m, c) for t in terms]
    tm = _pick_tile(m, (512,)) if m % 8 == 0 else m
    grid = (m // tm,)
    spec = pl.BlockSpec((tm, c), lambda i: (i, 0))
    out = pl.pallas_call(
        _make_addn_relu_kernel(len(flat)),
        out_shape=jax.ShapeDtypeStruct((m, c), jnp.float32),
        grid=grid,
        in_specs=[spec] * len(flat),
        out_specs=spec,
        compiler_params=pltpu.CompilerParams(
            dimension_semantics=("parallel",),
            vmem_limit_bytes=_VMEM_LIMIT),
    )(*flat)
    return out.reshape(n, h, w, c)


@functools.partial(jax.jit, static_argnames=("factor",))
def upsample_nearest(x, *, factor):
    # TODO(synk): nearest upsample could be fused into add_n_relu via an
    # index_map that reads the low-res block and expands in VMEM; kept as
    # plain-JAX data movement here.
    x = jnp.repeat(x, factor, axis=1)
    x = jnp.repeat(x, factor, axis=2)
    return x


# ----------------------------------------------------------------------------
# Deterministic parameter construction (mirrors the PyTorch __init__)
# ----------------------------------------------------------------------------
class KeyGen:
    def __init__(self, key):
        self._key = key

    def next(self):
        self._key, sub = jax.random.split(self._key)
        return sub


def make_convbn(kg, cin, cout, k, stride=1, pad=0):
    fan = k * k * cin
    w = jax.random.normal(kg.next(), (k, k, cin, cout), jnp.float32) / math.sqrt(fan)
    gamma = 1.0 + 0.1 * jax.random.normal(kg.next(), (cout,), jnp.float32)
    beta = 0.1 * jax.random.normal(kg.next(), (cout,), jnp.float32)
    return dict(w=w, scale=gamma, bias=beta, stride=stride, pad=pad, bn=True)


def make_conv_bias(kg, cin, cout, k):
    fan = k * k * cin
    w = jax.random.normal(kg.next(), (k, k, cin, cout), jnp.float32) / math.sqrt(fan)
    b = 0.1 * jax.random.normal(kg.next(), (cout,), jnp.float32)
    return dict(w=w, scale=jnp.ones((cout,), jnp.float32), bias=b,
                stride=1, pad=0, bn=False)


def make_bottleneck(kg, cin, mid, expansion, downsample):
    return dict(
        conv1=make_convbn(kg, cin, mid, 1),
        conv2=make_convbn(kg, mid, mid, 3, 1, 1),
        conv3=make_convbn(kg, mid, mid * expansion, 1),
        downsample=make_convbn(kg, cin, mid * expansion, 1) if downsample else None,
    )


def make_basic(kg, cin):
    return dict(conv1=make_convbn(kg, cin, cin, 3, 1, 1),
                conv2=make_convbn(kg, cin, cin, 3, 1, 1))


def make_module_block(kg, stage, out_branch, c):
    branches = [[make_basic(kg, c * 2 ** i) for _ in range(4)]
                for i in range(stage)]
    fuse = []
    for focus in range(out_branch):
        row = []
        for unfocus in range(stage):
            if focus == unfocus:
                row.append(None)
            elif focus < unfocus:
                row.append(dict(type="up",
                                conv=make_convbn(kg, c * 2 ** unfocus,
                                                 c * 2 ** focus, 1),
                                factor=2 ** (unfocus - focus)))
            else:
                ops = []
                for _ in range(focus - unfocus - 1):
                    ops.append(make_convbn(kg, c * 2 ** unfocus,
                                           c * 2 ** unfocus, 3, 2, 1))
                ops.append(make_convbn(kg, c * 2 ** unfocus,
                                       c * 2 ** focus, 3, 2, 1))
                row.append(dict(type="down", ops=ops))
        fuse.append(row)
    return dict(stage=stage, out_branch=out_branch, branches=branches, fuse=fuse)


def make_hrnet_params(key, c=32, out_key=12):
    kg = KeyGen(key)
    p = {}
    p["conv1"] = make_convbn(kg, 3, 64, 3, 2, 1)
    p["conv2"] = make_convbn(kg, 64, 64, 3, 2, 1)
    p["layer1"] = [make_bottleneck(kg, 64, 64, 4, True)] + \
                  [make_bottleneck(kg, 256, 64, 4, False) for _ in range(3)]
    p["transition1"] = [make_convbn(kg, 256, c, 3, 1, 1),
                        make_convbn(kg, 256, c * 2, 3, 2, 1)]
    p["stage2"] = [make_module_block(kg, 2, 2, c)]
    p["transition2"] = make_convbn(kg, c * 2, c * 4, 3, 2, 1)
    p["stage3"] = [make_module_block(kg, 3, 3, c) for _ in range(4)]
    p["transition3"] = make_convbn(kg, c * 4, c * 8, 3, 2, 1)
    p["stage4"] = [make_module_block(kg, 4, 4, c),
                   make_module_block(kg, 4, 4, c),
                   make_module_block(kg, 4, 1, c)]
    p["final"] = make_conv_bias(kg, c, out_key, 1)
    return p


# ----------------------------------------------------------------------------
# Forward pass (mirrors the PyTorch forward exactly)
# ----------------------------------------------------------------------------
def basic_block_fwd(x, p):
    out = conv_bn(x, p["conv1"], relu=True)
    out = conv_bn(out, p["conv2"], relu=True, residual=x)
    return out


def bottleneck_fwd(x, p):
    out = conv_bn(x, p["conv1"], relu=True)
    out = conv_bn(out, p["conv2"], relu=True)
    residual = conv_bn(x, p["downsample"]) if p["downsample"] is not None else x
    out = conv_bn(out, p["conv3"], relu=True, residual=residual)
    return out


def module_block_fwd(xs, p):
    stage, out_branch = p["stage"], p["out_branch"]
    outs = []
    for i in range(stage):
        b = xs[i]
        for bb in p["branches"][i]:
            b = basic_block_fwd(b, bb)
        outs.append(b)
    fused = []
    for focus in range(out_branch):
        terms = []
        for unfocus in range(stage):
            f = p["fuse"][focus][unfocus]
            if f is None:
                terms.append(outs[unfocus])
            elif f["type"] == "up":
                t = conv_bn(outs[unfocus], f["conv"], relu=False)
                terms.append(upsample_nearest(t, factor=f["factor"]))
            else:
                t = outs[unfocus]
                ops = f["ops"]
                for j, cp in enumerate(ops):
                    t = conv_bn(t, cp, relu=(j < len(ops) - 1))
                terms.append(t)
        fused.append(add_n_relu(terms))
    return fused


def hrnet_forward(params, x_nchw):
    x = jnp.transpose(x_nchw, (0, 2, 3, 1)).astype(jnp.float32)  # NCHW -> NHWC
    x = conv_bn(x, params["conv1"], relu=True)
    x = conv_bn(x, params["conv2"], relu=True)
    for b in params["layer1"]:
        x = bottleneck_fwd(x, b)
    xs = [conv_bn(x, params["transition1"][0], relu=True),
          conv_bn(x, params["transition1"][1], relu=True)]
    for mb in params["stage2"]:
        xs = module_block_fwd(xs, mb)
    xs = [xs[0], xs[1], conv_bn(xs[-1], params["transition2"], relu=True)]
    for mb in params["stage3"]:
        xs = module_block_fwd(xs, mb)
    xs = [xs[0], xs[1], xs[2], conv_bn(xs[-1], params["transition3"], relu=True)]
    for mb in params["stage4"]:
        xs = module_block_fwd(xs, mb)
    out = conv_bn(xs[0], params["final"], relu=False)  # 1x1 conv with bias
    return jnp.transpose(out, (0, 3, 1, 2))  # NHWC -> NCHW


if __name__ == "__main__":
    key = jax.random.PRNGKey(0)
    pkey, xkey = jax.random.split(key)
    params = make_hrnet_params(pkey, c=32, out_key=12)
    x = jax.random.normal(xkey, (2, 3, 32, 32), jnp.float32)  # NCHW like PyTorch
    out = hrnet_forward(params, x)
    out = jax.block_until_ready(out)
    assert out.shape == (2, 12, 8, 8), out.shape
    assert bool(jnp.all(jnp.isfinite(out)))
    print("KERNEL_OK")
</pallas_src>

<mosaic_0001>
module attributes {stable_mosaic.version = 11 : i64} {
  func.func @kernel(%arg0: i32, %arg1: i32, %arg2: memref<512x27xbf16, #tpu.memory_space<vmem>>, %arg3: memref<27x64xbf16, #tpu.memory_space<vmem>>, %arg4: memref<1x64xf32, #tpu.memory_space<vmem>>, %arg5: memref<1x64xf32, #tpu.memory_space<vmem>>, %arg6: memref<512x64xf32, #tpu.memory_space<vmem>>, %arg7: memref<512x64xf32, #tpu.memory_space<vmem>>) attributes {dimension_semantics = [#tpu.dimension_semantics<parallel>, #tpu.dimension_semantics<arbitrary>], iteration_bounds = array<i64: 1, 1>, scalar_prefetch = 0 : i64, scratch_operands = 1 : i64, tpu.core_type = #tpu.core_type<tc>, window_params = [{transform_indices = @transform_0, window_bounds = array<i64: 512, 27>}, {transform_indices = @transform_1, window_bounds = array<i64: 27, 64>}, {transform_indices = @transform_2, window_bounds = array<i64: 1, 64>}, {transform_indices = @transform_3, window_bounds = array<i64: 1, 64>}, {transform_indices = @transform_4, window_bounds = array<i64: 512, 64>}]} {
    %c0_i32 = arith.constant 0 : i32
    %0 = arith.cmpi eq, %arg1, %c0_i32 : i32
    %1 = arith.extui %0 : i1 to i32
    %c0_i32_0 = arith.constant 0 : i32
    %2 = arith.cmpi ne, %1, %c0_i32_0 : i32
    scf.if %2 {
      %cst_10 = arith.constant 0.000000e+00 : f32
      %12 = vector.broadcast %cst_10 : f32 to vector<512x64xf32>
      %c0_11 = arith.constant 0 : index
      %c0_12 = arith.constant 0 : index
      %13 = vector.load %arg7[%c0_11, %c0_12] : memref<512x64xf32, #tpu.memory_space<vmem>>, vector<512x64xf32>
      tpu.vector_store %arg7[%c0_11, %c0_12], %12 {strides = array<i32>} : memref<512x64xf32, #tpu.memory_space<vmem>>, vector<512x64xf32>,
    } else {
    }
    %c0 = arith.constant 0 : index
    %c0_1 = arith.constant 0 : index
    %3 = vector.load %arg7[%c0, %c0_1] : memref<512x64xf32, #tpu.memory_space<vmem>>, vector<512x64xf32>
    %c0_2 = arith.constant 0 : index
    %c0_3 = arith.constant 0 : index
    %4 = vector.load %arg2[%c0_2, %c0_3] : memref<512x27xbf16, #tpu.memory_space<vmem>>, vector<512x27xbf16>
    %c0_4 = arith.constant 0 : index
    %c0_5 = arith.constant 0 : index
    %5 = vector.load %arg3[%c0_4, %c0_5] : memref<27x64xbf16, #tpu.memory_space<vmem>>, vector<27x64xbf16>
    %cst = arith.constant dense<0.000000e+00> : vector<512x64xf32>
    %6 = tpu.matmul %4, %5, %cst {dimension_numbers = #tpu.dot_dimension_numbers<[1], [0], [0], [1], [0, 0, 1, 1], [], []>} : vector<512x27xbf16>, vector<27x64xbf16>, vector<512x64xf32> -> vector<512x64xf32>
    %7 = arith.addf %3, %6 : vector<512x64xf32>
    %c0_6 = arith.constant 0 : index
    %c0_7 = arith.constant 0 : index
    %8 = vector.load %arg7[%c0_6, %c0_7] : memref<512x64xf32, #tpu.memory_space<vmem>>, vector<512x64xf32>
    tpu.vector_store %arg7[%c0_6, %c0_7], %7 {strides = array<i32>} : memref<512x64xf32, #tpu.memory_space<vmem>>, vector<512x64xf32>,
    %c0_i32_8 = arith.constant 0 : i32
    %9 = arith.cmpi eq, %arg1, %c0_i32_8 : i32
    %10 = arith.extui %9 : i1 to i32
    %c0_i32_9 = arith.constant 0 : i32
    %11 = arith.cmpi ne, %10, %c0_i32_9 : i32
    scf.if %11 {
      %c0_10 = arith.constant 0 : index
      %c0_11 = arith.constant 0 : index
      %12 = vector.load %arg7[%c0_10, %c0_11] : memref<512x64xf32, #tpu.memory_space<vmem>>, vector<512x64xf32>
      %c0_12 = arith.constant 0 : index
      %c0_13 = arith.constant 0 : index
      %13 = vector.load %arg4[%c0_12, %c0_13] : memref<1x64xf32, #tpu.memory_space<vmem>>, vector<1x64xf32>
      %c0_14 = arith.constant 0 : index
      %c0_15 = arith.constant 0 : index
      %14 = vector.load %arg5[%c0_14, %c0_15] : memref<1x64xf32, #tpu.memory_space<vmem>>, vector<1x64xf32>
      %cst_16 = arith.constant dense<0.000000e+00> : vector<64xf32>
      %15 = vector.multi_reduction <add>, %12, %cst_16 [0] : vector<512x64xf32> to vector<64xf32>
      %16 = vector.shape_cast %15 : vector<64xf32> to vector<1x64xf32>
      %cst_17 = arith.constant 5.120000e+02 : f32
      %17 = vector.broadcast %cst_17 : f32 to vector<1x64xf32>
      %18 = arith.divf %16, %17 : vector<1x64xf32>
      %19 = vector.broadcast %18 : vector<1x64xf32> to vector<512x64xf32>
      %20 = arith.subf %12, %19 : vector<512x64xf32>
      %21 = arith.mulf %20, %20 : vector<512x64xf32>
      %cst_18 = arith.constant dense<0.000000e+00> : vector<64xf32>
      %22 = vector.multi_reduction <add>, %21, %cst_18 [0] : vector<512x64xf32> to vector<64xf32>
      %23 = vector.shape_cast %22 : vector<64xf32> to vector<1x64xf32>
      %cst_19 = arith.constant 5.120000e+02 : f32
      %24 = vector.broadcast %cst_19 : f32 to vector<1x64xf32>
      %25 = arith.divf %23, %24 : vector<1x64xf32>
      %26 = vector.broadcast %18 : vector<1x64xf32> to vector<512x64xf32>
      %27 = arith.subf %12, %26 : vector<512x64xf32>
      %cst_20 = arith.constant 9.99999974E-6 : f32
      %28 = vector.broadcast %cst_20 : f32 to vector<1x64xf32>
      %29 = arith.addf %25, %28 : vector<1x64xf32>
      %30 = math.rsqrt %29 : vector<1x64xf32>
      %31 = vector.broadcast %30 : vector<1x64xf32> to vector<512x64xf32>
      %32 = arith.mulf %27, %31 : vector<512x64xf32>
      %33 = vector.broadcast %13 : vector<1x64xf32> to vector<512x64xf32>
      %34 = arith.mulf %32, %33 : vector<512x64xf32>
      %35 = vector.broadcast %14 : vector<1x64xf32> to vector<512x64xf32>
      %36 = arith.addf %34, %35 : vector<512x64xf32>
      %cst_21 = arith.constant 0.000000e+00 : f32
      %37 = vector.broadcast %cst_21 : f32 to vector<512x64xf32>
      %38 = arith.maximumf %36, %37 : vector<512x64xf32>
      %c0_22 = arith.constant 0 : index
      %c0_23 = arith.constant 0 : index
      %39 = vector.load %arg6[%c0_22, %c0_23] : memref<512x64xf32, #tpu.memory_space<vmem>>, vector<512x64xf32>
      tpu.vector_store %arg6[%c0_22, %c0_23], %38 {strides = array<i32>} : memref<512x64xf32, #tpu.memory_space<vmem>>, vector<512x64xf32>,
    } else {
    }
    return
  }
  func.func @transform_0(%arg0: i32, %arg1: i32) -> (i32, i32) {
    %c0_i32 = arith.constant 0 : i32
    %c0_i32_0 = arith.constant 0 : i32
    return %c0_i32, %arg1 : i32, i32
  }
  func.func @transform_1(%arg0: i32, %arg1: i32) -> (i32, i32) {
    %c0_i32 = arith.constant 0 : i32
    return %arg1, %arg0 : i32, i32
  }
  func.func @transform_2(%arg0: i32, %arg1: i32) -> (i32, i32) {
    %c0_i32 = arith.constant 0 : i32
    %c0_i32_0 = arith.constant 0 : i32
    return %c0_i32, %arg0 : i32, i32
  }
  func.func @transform_3(%arg0: i32, %arg1: i32) -> (i32, i32) {
    %c0_i32 = arith.constant 0 : i32
    %c0_i32_0 = arith.constant 0 : i32
    return %c0_i32, %arg0 : i32, i32
  }
  func.func @transform_4(%arg0: i32, %arg1: i32) -> (i32, i32) {
    %c0_i32 = arith.constant 0 : i32
    %c0_i32_0 = arith.constant 0 : i32
    return %c0_i32, %arg0 : i32, i32
  }
}

</mosaic_0001>

<llo_original>
// kernel: _conv_slab_nores.1
$region0: #{_conv_slab_nores.1}
  #allocation0 [shape = 'u32[]', space=smem, size = 0x4, offset = 0x4, fixed_abs, tag = 'smem constant byte address 0x4 - core index']
  #allocation1 [shape = 'u32[144,128]{1,0:T(1,128)}', space=vmem, size = 0x12000, scoped, tag = 'internal scratch']
  #allocation2 [shape = 'f32[512,64]{1,0:T(8,128)}', space=vmem, size = 0x40000, scoped, tag = 'scratch operand']
  %s0 = inlined_call_operand.vmem [shape: bf16[512,27], index: 0, kind: input, shape index: {}]
  %s1 = inlined_call_operand.vmem [shape: bf16[27,64], index: 1, kind: input, shape index: {}]
  %s2 = inlined_call_operand.vmem [shape: f32[1,64], index: 2, kind: input, shape index: {}]
  %s3 = inlined_call_operand.vmem [shape: f32[1,64], index: 3, kind: input, shape index: {}]
  %s4 = inlined_call_operand.hbm [shape: f32[512,64], index: 4, kind: output, shape index: {}]
  %s5 = sld [smem:[#allocation0]]
  $region34: #{_conv_slab_nores.1} parent=0
    _
  %s7 = ssub.s32 1, %s5
  %s8 = scalar_select 0, %s7, %s5
  $region1: #{_conv_slab_nores.1} parent=0
    #allocation3 [shape = 'u8[262144]{0}', space=vmem, size = 0x40000, scoped, tag = 'output window, operand 0, single buffered']
    #allocation4 [shape = 's32[1]{0}', space=sflag, size = 0x4, scoped, tag = 'scoped memory for _conv_slab_nores.1']
    %9 = vsyncpa [#allocation4], 0
    // Predicated region
    $region2: #{_conv_slab_nores.1} parent=1 // pred_check
      _
    $region3: #{_conv_slab_nores.1} parent=1 // pred_check_branch
      %11 = sbr.rel (0) target = $region5
    $region4: #{_conv_slab_nores.1} parent=1 // pred_region
      _
    $region5: #{_conv_slab_nores.1} parent=1 // pred_fallthru
      _
    // Predicated region
    $region6: #{_conv_slab_nores.1} parent=1 // pred_check
      _
    $region7: #{_conv_slab_nores.1} parent=1 // pred_check_branch
      %13 = sbr.rel (0) target = $region9
    $region8: #{_conv_slab_nores.1} parent=1 // pred_region
      _
    $region9: #{_conv_slab_nores.1} parent=1 // pred_fallthru
      _
    // Predicated region
    $region10: #{_conv_slab_nores.1} parent=1 // pred_check
      _
    $region11: #{_conv_slab_nores.1} parent=1 // pred_check_branch
      %15 = sbr.rel (0) target = $region13
    $region12: #{_conv_slab_nores.1} parent=1 // pred_region
      _
    $region13: #{_conv_slab_nores.1} parent=1 // pred_fallthru
      _
    // Predicated region
    $region14: #{_conv_slab_nores.1} parent=1 // pred_check
      _
    $region15: #{_conv_slab_nores.1} parent=1 // pred_check_branch
      %17 = sbr.rel (0) target = $region17
    $region16: #{_conv_slab_nores.1} parent=1 // pred_region
      _
    $region17: #{_conv_slab_nores.1} parent=1 // pred_fallthru
      _
    %p19 = scmp.eq.s32.totalorder 0, 0
    // Predicated region
    $region18: #{_conv_slab_nores.1} parent=1 // pred_check
      %p20 = pneg %p19
    $region19: #{_conv_slab_nores.1} parent=1 // pred_check_branch
      %22 = sbr.rel (%p20) target = $region21
    $region20: #{_conv_slab_nores.1} parent=1 // pred_region
      %vm23 = vcmask 523264
      %24 = vst.msk [vmem:[#allocation2] sm:$0xff] %vm23, 0.0
      %25 = vst.msk [vmem:[#allocation2 + $0x8] sm:$0xff] %vm23, 0.0
      %26 = vst.msk [vmem:[#allocation2 + $0x10] sm:$0xff] %vm23, 0.0
      %27 = vst.msk [vmem:[#allocation2 + $0x18] sm:$0xff] %vm23, 0.0
      %28 = vst.msk [vmem:[#allocation2 + $0x20] sm:$0xff] %vm23, 0.0
      %29 = vst.msk [vmem:[#allocation2 + $0x28] sm:$0xff] %vm23, 0.0
      %30 = vst.msk [vmem:[#allocation2 + $0x30] sm:$0xff] %vm23, 0.0
      %31 = vst.msk [vmem:[#allocation2 + $0x38] sm:$0xff] %vm23, 0.0
      %32 = vst.msk [vmem:[#allocation2 + $0x40] sm:$0xff] %vm23, 0.0
      %33 = vst.msk [vmem:[#allocation2 + $0x48] sm:$0xff] %vm23, 0.0
      %34 = vst.msk [vmem:[#allocation2 + $0x50] sm:$0xff] %vm23, 0.0
      %35 = vst.msk [vmem:[#allocation2 + $0x58] sm:$0xff] %vm23, 0.0
      %36 = vst.msk [vmem:[#allocation2 + $0x60] sm:$0xff] %vm23, 0.0
      %37 = vst.msk [vmem:[#allocation2 + $0x68] sm:$0xff] %vm23, 0.0
      %38 = vst.msk [vmem:[#allocation2 + $0x70] sm:$0xff] %vm23, 0.0
      %39 = vst.msk [vmem:[#allocation2 + $0x78] sm:$0xff] %vm23, 0.0
      %40 = vst.msk [vmem:[#allocation2 + $0x80] sm:$0xff] %vm23, 0.0
      %41 = vst.msk [vmem:[#allocation2 + $0x88] sm:$0xff] %vm23, 0.0
      %42 = vst.msk [vmem:[#allocation2 + $0x90] sm:$0xff] %vm23, 0.0
      %43 = vst.msk [vmem:[#allocation2 + $0x98] sm:$0xff] %vm23, 0.0
      %44 = vst.msk [vmem:[#allocation2 + $0xa0] sm:$0xff] %vm23, 0.0
      %45 = vst.msk [vmem:[#allocation2 + $0xa8] sm:$0xff] %vm23, 0.0
      %46 = vst.msk [vmem:[#allocation2 + $0xb0] sm:$0xff] %vm23, 0.0
      %47 = vst.msk [vmem:[#allocation2 + $0xb8] sm:$0xff] %vm23, 0.0
      %48 = vst.msk [vmem:[#allocation2 + $0xc0] sm:$0xff] %vm23, 0.0
      %49 = vst.msk [vmem:[#allocation2 + $0xc8] sm:$0xff] %vm23, 0.0
      %50 = vst.msk [vmem:[#allocation2 + $0xd0] sm:$0xff] %vm23, 0.0
      %51 = vst.msk [vmem:[#allocation2 + $0xd8] sm:$0xff] %vm23, 0.0
      %52 = vst.msk [vmem:[#allocation2 + $0xe0] sm:$0xff] %vm23, 0.0
      %53 = vst.msk [vmem:[#allocation2 + $0xe8] sm:$0xff] %vm23, 0.0
      %54 = vst.msk [vmem:[#allocation2 + $0xf0] sm:$0xff] %vm23, 0.0
      %55 = vst.msk [vmem:[#allocation2 + $0xf8] sm:$0xff] %vm23, 0.0
      %56 = vst.msk [vmem:[#allocation2 + $0x100] sm:$0xff] %vm23, 0.0
      %57 = vst.msk [vmem:[#allocation2 + $0x108] sm:$0xff] %vm23, 0.0
      %58 = vst.msk [vmem:[#allocation2 + $0x110] sm:$0xff] %vm23, 0.0
      %59 = vst.msk [vmem:[#allocation2 + $0x118] sm:$0xff] %vm23, 0.0
      %60 = vst.msk [vmem:[#allocation2 + $0x120] sm:$0xff] %vm23, 0.0
      %61 = vst.msk [vmem:[#allocation2 + $0x128] sm:$0xff] %vm23, 0.0
      %62 = vst.msk [vmem:[#allocation2 + $0x130] sm:$0xff] %vm23, 0.0
      %63 = vst.msk [vmem:[#allocation2 + $0x138] sm:$0xff] %vm23, 0.0
      %64 = vst.msk [vmem:[#allocation2 + $0x140] sm:$0xff] %vm23, 0.0
      %65 = vst.msk [vmem:[#allocation2 + $0x148] sm:$0xff] %vm23, 0.0
      %66 = vst.msk [vmem:[#allocation2 + $0x150] sm:$0xff] %vm23, 0.0
      %67 = vst.msk [vmem:[#allocation2 + $0x158] sm:$0xff] %vm23, 0.0
      %68 = vst.msk [vmem:[#allocation2 + $0x160] sm:$0xff] %vm23, 0.0
      %69 = vst.msk [vmem:[#allocation2 + $0x168] sm:$0xff] %vm23, 0.0
      %70 = vst.msk [vmem:[#allocation2 + $0x170] sm:$0xff] %vm23, 0.0
      %71 = vst.msk [vmem:[#allocation2 + $0x178] sm:$0xff] %vm23, 0.0
      %72 = vst.msk [vmem:[#allocation2 + $0x180] sm:$0xff] %vm23, 0.0
      %73 = vst.msk [vmem:[#allocation2 + $0x188] sm:$0xff] %vm23, 0.0
      %74 = vst.msk [vmem:[#allocation2 + $0x190] sm:$0xff] %vm23, 0.0
      %75 = vst.msk [vmem:[#allocation2 + $0x198] sm:$0xff] %vm23, 0.0
      %76 = vst.msk [vmem:[#allocation2 + $0x1a0] sm:$0xff] %vm23, 0.0
      %77 = vst.msk [vmem:[#allocation2 + $0x1a8] sm:$0xff] %vm23, 0.0
      %78 = vst.msk [vmem:[#allocation2 + $0x1b0] sm:$0xff] %vm23, 0.0
      %79 = vst.msk [vmem:[#allocation2 + $0x1b8] sm:$0xff] %vm23, 0.0
      %80 = vst.msk [vmem:[#allocation2 + $0x1c0] sm:$0xff] %vm23, 0.0
      %81 = vst.msk [vmem:[#allocation2 + $0x1c8] sm:$0xff] %vm23, 0.0
      %82 = vst.msk [vmem:[#allocation2 + $0x1d0] sm:$0xff] %vm23, 0.0
      %83 = vst.msk [vmem:[#allocation2 + $0x1d8] sm:$0xff] %vm23, 0.0
      %84 = vst.msk [vmem:[#allocation2 + $0x1e0] sm:$0xff] %vm23, 0.0
      %85 = vst.msk [vmem:[#allocation2 + $0x1e8] sm:$0xff] %vm23, 0.0
      %86 = vst.msk [vmem:[#allocation2 + $0x1f0] sm:$0xff] %vm23, 0.0
      %87 = vst.msk [vmem:[#allocation2 + $0x1f8] sm:$0xff] %vm23, 0.0
    $region21: #{_conv_slab_nores.1} parent=1 // pred_fallthru
      _
    %v88 = vld [vmem:[#allocation2] sm:$0xff]
    %v89 = vld [vmem:[#allocation2 + $0x8] sm:$0xff]
    %v90 = vld [vmem:[#allocation2 + $0x10] sm:$0xff]
    %v91 = vld [vmem:[#allocation2 + $0x18] sm:$0xff]
    %v92 = vld [vmem:[#allocation2 + $0x20] sm:$0xff]
    %v93 = vld [vmem:[#allocation2 + $0x28] sm:$0xff]
    %v94 = vld [vmem:[#allocation2 + $0x30] sm:$0xff]
    %v95 = vld [vmem:[#allocation2 + $0x38] sm:$0xff]
    %v96 = vld [vmem:[#allocation2 + $0x40] sm:$0xff]
    %v97 = vld [vmem:[#allocation2 + $0x48] sm:$0xff]
    %v98 = vld [vmem:[#allocation2 + $0x50] sm:$0xff]
    %v99 = vld [vmem:[#allocation2 + $0x58] sm:$0xff]
    %v100 = vld [vmem:[#allocation2 + $0x60] sm:$0xff]
    %v101 = vld [vmem:[#allocation2 + $0x68] sm:$0xff]
    %v102 = vld [vmem:[#allocation2 + $0x70] sm:$0xff]
    %v103 = vld [vmem:[#allocation2 + $0x78] sm:$0xff]
    %v104 = vld [vmem:[#allocation2 + $0x80] sm:$0xff]
    %v105 = vld [vmem:[#allocation2 + $0x88] sm:$0xff]
    %v106 = vld [vmem:[#allocation2 + $0x90] sm:$0xff]
    %v107 = vld [vmem:[#allocation2 + $0x98] sm:$0xff]
    %v108 = vld [vmem:[#allocation2 + $0xa0] sm:$0xff]
    %v109 = vld [vmem:[#allocation2 + $0xa8] sm:$0xff]
    %v110 = vld [vmem:[#allocation2 + $0xb0] sm:$0xff]
    %v111 = vld [vmem:[#allocation2 + $0xb8] sm:$0xff]
    %v112 = vld [vmem:[#allocation2 + $0xc0] sm:$0xff]
    %v113 = vld [vmem:[#allocation2 + $0xc8] sm:$0xff]
    %v114 = vld [vmem:[#allocation2 + $0xd0] sm:$0xff]
    %v115 = vld [vmem:[#allocation2 + $0xd8] sm:$0xff]
    %v116 = vld [vmem:[#allocation2 + $0xe0] sm:$0xff]
    %v117 = vld [vmem:[#allocation2 + $0xe8] sm:$0xff]
    %v118 = vld [vmem:[#allocation2 + $0xf0] sm:$0xff]
    %v119 = vld [vmem:[#allocation2 + $0xf8] sm:$0xff]
    %v120 = vld [vmem:[#allocation2 + $0x100] sm:$0xff]
    %v121 = vld [vmem:[#allocation2 + $0x108] sm:$0xff]
    %v122 = vld [vmem:[#allocation2 + $0x110] sm:$0xff]
    %v123 = vld [vmem:[#allocation2 + $0x118] sm:$0xff]
    %v124 = vld [vmem:[#allocation2 + $0x120] sm:$0xff]
    %v125 = vld [vmem:[#allocation2 + $0x128] sm:$0xff]
    %v126 = vld [vmem:[#allocation2 + $0x130] sm:$0xff]
    %v127 = vld [vmem:[#allocation2 + $0x138] sm:$0xff]
    %v128 = vld [vmem:[#allocation2 + $0x140] sm:$0xff]
    %v129 = vld [vmem:[#allocation2 + $0x148] sm:$0xff]
    %v130 = vld [vmem:[#allocation2 + $0x150] sm:$0xff]
    %v131 = vld [vmem:[#allocation2 + $0x158] sm:$0xff]
    %v132 = vld [vmem:[#allocation2 + $0x160] sm:$0xff]
    %v133 = vld [vmem:[#allocation2 + $0x168] sm:$0xff]
    %v134 = vld [vmem:[#allocation2 + $0x170] sm:$0xff]
    %v135 = vld [vmem:[#allocation2 + $0x178] sm:$0xff]
    %v136 = vld [vmem:[#allocation2 + $0x180] sm:$0xff]
    %v137 = vld [vmem:[#allocation2 + $0x188] sm:$0xff]
    %v138 = vld [vmem:[#allocation2 + $0x190] sm:$0xff]
    %v139 = vld [vmem:[#allocation2 + $0x198] sm:$0xff]
    %v140 = vld [vmem:[#allocation2 + $0x1a0] sm:$0xff]
    %v141 = vld [vmem:[#allocation2 + $0x1a8] sm:$0xff]
    %v142 = vld [vmem:[#allocation2 + $0x1b0] sm:$0xff]
    %v143 = vld [vmem:[#allocation2 + $0x1b8] sm:$0xff]
    %v144 = vld [vmem:[#allocation2 + $0x1c0] sm:$0xff]
    %v145 = vld [vmem:[#allocation2 + $0x1c8] sm:$0xff]
    %v146 = vld [vmem:[#allocation2 + $0x1d0] sm:$0xff]
    %v147 = vld [vmem:[#allocation2 + $0x1d8] sm:$0xff]
    %v148 = vld [vmem:[#allocation2 + $0x1e0] sm:$0xff]
    %v149 = vld [vmem:[#allocation2 + $0x1e8] sm:$0xff]
    %v150 = vld [vmem:[#allocation2 + $0x1f0] sm:$0xff]
    %v151 = vld [vmem:[#allocation2 + $0x1f8] sm:$0xff]
    %v152 = vld [vmem:[%s0] sm:$0xf]
    %v153 = vld [vmem:[%s0 + $0x4] sm:$0xf]
    %v154 = vld [vmem:[%s0 + $0x8] sm:$0xf]
    %v155 = vld [vmem:[%s0 + $0xc] sm:$0xf]
    %v156 = vld [vmem:[%s0 + $0x10] sm:$0xf]
    %v157 = vld [vmem:[%s0 + $0x14] sm:$0xf]
    %v158 = vld [vmem:[%s0 + $0x18] sm:$0xf]
    %v159 = vld [vmem:[%s0 + $0x1c] sm:$0xf]
    %v160 = vld [vmem:[%s0 + $0x20] sm:$0xf]
    %v161 = vld [vmem:[%s0 + $0x24] sm:$0xf]
    %v162 = vld [vmem:[%s0 + $0x28] sm:$0xf]
    %v163 = vld [vmem:[%s0 + $0x2c] sm:$0xf]
    %v164 = vld [vmem:[%s0 + $0x30] sm:$0xf]
    %v165 = vld [vmem:[%s0 + $0x34] sm:$0xf]
    %v166 = vld [vmem:[%s0 + $0x38] sm:$0xf]
    %v167 = vld [vmem:[%s0 + $0x3c] sm:$0xf]
    %v168 = vld [vmem:[%s0 + $0x40] sm:$0xf]
    %v169 = vld [vmem:[%s0 + $0x44] sm:$0xf]
    %v170 = vld [vmem:[%s0 + $0x48] sm:$0xf]
    %v171 = vld [vmem:[%s0 + $0x4c] sm:$0xf]
    %v172 = vld [vmem:[%s0 + $0x50] sm:$0xf]
    %v173 = vld [vmem:[%s0 + $0x54] sm:$0xf]
    %v174 = vld [vmem:[%s0 + $0x58] sm:$0xf]
    %v175 = vld [vmem:[%s0 + $0x5c] sm:$0xf]
    %v176 = vld [vmem:[%s0 + $0x60] sm:$0xf]
    %v177 = vld [vmem:[%s0 + $0x64] sm:$0xf]
    %v178 = vld [vmem:[%s0 + $0x68] sm:$0xf]
    %v179 = vld [vmem:[%s0 + $0x6c] sm:$0xf]
    %v180 = vld [vmem:[%s0 + $0x70] sm:$0xf]
    %v181 = vld [vmem:[%s0 + $0x74] sm:$0xf]
    %v182 = vld [vmem:[%s0 + $0x78] sm:$0xf]
    %v183 = vld [vmem:[%s0 + $0x7c] sm:$0xf]
    %v184 = vld [vmem:[%s0 + $0x80] sm:$0xf]
    %v185 = vld [vmem:[%s0 + $0x84] sm:$0xf]
    %v186 = vld [vmem:[%s0 + $0x88] sm:$0xf]
    %v187 = vld [vmem:[%s0 + $0x8c] sm:$0xf]
    %v188 = vld [vmem:[%s0 + $0x90] sm:$0xf]
    %v189 = vld [vmem:[%s0 + $0x94] sm:$0xf]
    %v190 = vld [vmem:[%s0 + $0x98] sm:$0xf]
    %v191 = vld [vmem:[%s0 + $0x9c] sm:$0xf]
    %v192 = vld [vmem:[%s0 + $0xa0] sm:$0xf]
    %v193 = vld [vmem:[%s0 + $0xa4] sm:$0xf]
    %v194 = vld [vmem:[%s0 + $0xa8] sm:$0xf]
    %v195 = vld [vmem:[%s0 + $0xac] sm:$0xf]
    %v196 = vld [vmem:[%s0 + $0xb0] sm:$0xf]
    %v197 = vld [vmem:[%s0 + $0xb4] sm:$0xf]
    %v198 = vld [vmem:[%s0 + $0xb8] sm:$0xf]
    %v199 = vld [vmem:[%s0 + $0xbc] sm:$0xf]
    %v200 = vld [vmem:[%s0 + $0xc0] sm:$0xf]
    %v201 = vld [vmem:[%s0 + $0xc4] sm:$0xf]
    %v202 = vld [vmem:[%s0 + $0xc8] sm:$0xf]
    %v203 = vld [vmem:[%s0 + $0xcc] sm:$0xf]
    %v204 = vld [vmem:[%s0 + $0xd0] sm:$0xf]
    %v205 = vld [vmem:[%s0 + $0xd4] sm:$0xf]
    %v206 = vld [vmem:[%s0 + $0xd8] sm:$0xf]
    %v207 = vld [vmem:[%s0 + $0xdc] sm:$0xf]
    %v208 = vld [vmem:[%s0 + $0xe0] sm:$0xf]
    %v209 = vld [vmem:[%s0 + $0xe4] sm:$0xf]
    %v210 = vld [vmem:[%s0 + $0xe8] sm:$0xf]
    %v211 = vld [vmem:[%s0 + $0xec] sm:$0xf]
    %v212 = vld [vmem:[%s0 + $0xf0] sm:$0xf]
    %v213 = vld [vmem:[%s0 + $0xf4] sm:$0xf]
    %v214 = vld [vmem:[%s0 + $0xf8] sm:$0xf]
    %v215 = vld [vmem:[%s0 + $0xfc] sm:$0xf]
    %v216 = vld [vmem:[%s1] sm:$0xf]
    %v217 = vld [vmem:[%s1 + $0x4] sm:$0xf]
    %v218 = vld [vmem:[%s1 + $0x8] sm:$0xf]
    %v219 = vld [vmem:[%s1 + $0xc] sm:$0x3]
    %v284 = vunpack.c.l.b16 %v152
    %v285 = vunpack.c.l.b16 %v153
    %v286 = vunpack.c.l.b16 %v154
    %v287 = vunpack.c.l.b16 %v155
    %v288 = vunpack.c.l.b16 %v156
    %v289 = vunpack.c.l.b16 %v157
    %v290 = vunpack.c.l.b16 %v158
    %v291 = vunpack.c.l.b16 %v159
    %v292 = vunpack.c.l.b16 %v160
    %v293 = vunpack.c.l.b16 %v161
    %v294 = vunpack.c.l.b16 %v162
    %v295 = vunpack.c.l.b16 %v163
    %v296 = vunpack.c.l.b16 %v164
    %v297 = vunpack.c.l.b16 %v165
    %v298 = vunpack.c.l.b16 %v166
    %v299 = vunpack.c.l.b16 %v167
    %v300 = vunpack.c.l.b16 %v168
    %v301 = vunpack.c.l.b16 %v169
    %v302 = vunpack.c.l.b16 %v170
    %v303 = vunpack.c.l.b16 %v171
    %v304 = vunpack.c.l.b16 %v172
    %v305 = vunpack.c.l.b16 %v173
    %v306 = vunpack.c.l.b16 %v174
    %v307 = vunpack.c.l.b16 %v175
    %v308 = vunpack.c.l.b16 %v176
    %v309 = vunpack.c.l.b16 %v177
    %v310 = vunpack.c.l.b16 %v178
    %v311 = vunpack.c.l.b16 %v179
    %v312 = vunpack.c.l.b16 %v180
    %v313 = vunpack.c.l.b16 %v181
    %v314 = vunpack.c.l.b16 %v182
    %v315 = vunpack.c.l.b16 %v183
    %v316 = vunpack.c.l.b16 %v184
    %v317 = vunpack.c.l.b16 %v185
    %v318 = vunpack.c.l.b16 %v186
    %v319 = vunpack.c.l.b16 %v187
    %v320 = vunpack.c.l.b16 %v188
    %v321 = vunpack.c.l.b16 %v189
    %v322 = vunpack.c.l.b16 %v190
    %v323 = vunpack.c.l.b16 %v191
    %v324 = vunpack.c.l.b16 %v192
    %v325 = vunpack.c.l.b16 %v193
    %v326 = vunpack.c.l.b16 %v194
    %v327 = vunpack.c.l.b16 %v195
    %v328 = vunpack.c.l.b16 %v196
    %v329 = vunpack.c.l.b16 %v197
    %v330 = vunpack.c.l.b16 %v198
    %v331 = vunpack.c.l.b16 %v199
    %v332 = vunpack.c.l.b16 %v200
    %v333 = vunpack.c.l.b16 %v201
    %v334 = vunpack.c.l.b16 %v202
    %v335 = vunpack.c.l.b16 %v203
    %v336 = vunpack.c.l.b16 %v204
    %v337 = vunpack.c.l.b16 %v205
    %v338 = vunpack.c.l.b16 %v206
    %v339 = vunpack.c.l.b16 %v207
    %v340 = vunpack.c.l.b16 %v208
    %v341 = vunpack.c.l.b16 %v209
    %v342 = vunpack.c.l.b16 %v210
    %v343 = vunpack.c.l.b16 %v211
    %v344 = vunpack.c.l.b16 %v212
    %v345 = vunpack.c.l.b16 %v213
    %v346 = vunpack.c.l.b16 %v214
    %v347 = vunpack.c.l.b16 %v215
    %v348 = vpack.c.b16 %v285, %v284
    %v349 = vpack.c.b16 %v287, %v286
    %v350 = vpack.c.b16 %v289, %v288
    %v351 = vpack.c.b16 %v291, %v290
    %v352 = vpack.c.b16 %v293, %v292
    %v353 = vpack.c.b16 %v295, %v294
    %v354 = vpack.c.b16 %v297, %v296
    %v355 = vpack.c.b16 %v299, %v298
    %v356 = vpack.c.b16 %v301, %v300
    %v357 = vpack.c.b16 %v303, %v302
    %v358 = vpack.c.b16 %v305, %v304
    %v359 = vpack.c.b16 %v307, %v306
    %v360 = vpack.c.b16 %v309, %v308
    %v361 = vpack.c.b16 %v311, %v310
    %v362 = vpack.c.b16 %v313, %v312
    %v363 = vpack.c.b16 %v315, %v314
    %v364 = vpack.c.b16 %v317, %v316
    %v365 = vpack.c.b16 %v319, %v318
    %v366 = vpack.c.b16 %v321, %v320
    %v367 = vpack.c.b16 %v323, %v322
    %v368 = vpack.c.b16 %v325, %v324
    %v369 = vpack.c.b16 %v327, %v326
    %v370 = vpack.c.b16 %v329, %v328
    %v371 = vpack.c.b16 %v331, %v330
    %v372 = vpack.c.b16 %v333, %v332
    %v373 = vpack.c.b16 %v335, %v334
    %v374 = vpack.c.b16 %v337, %v336
    %v375 = vpack.c.b16 %v339, %v338
    %v376 = vpack.c.b16 %v341, %v340
    %v377 = vpack.c.b16 %v343, %v342
    %v378 = vpack.c.b16 %v345, %v344
    %v379 = vpack.c.b16 %v347, %v346
    %v384 = vunpack.c.l.b16 %v216
    %v385 = vunpack.c.l.b16 %v217
    %v386 = vunpack.c.l.b16 %v218
    %v387 = vunpack.c.l.b16 %v219
    %v388 = vpack.c.b16 %v385, %v384
    %v389 = vpack.c.b16 %v387, %v386
    %vm391 = vcmask 220160
    %v393 = vsel %vm391, %v348, 0
    %v396 = vsel %vm391, %v349, 0
    %v399 = vsel %vm391, %v350, 0
    %v402 = vsel %vm391, %v351, 0
    %v405 = vsel %vm391, %v352, 0
    %v408 = vsel %vm391, %v353, 0
    %v411 = vsel %vm391, %v354, 0
    %v414 = vsel %vm391, %v355, 0
    %v417 = vsel %vm391, %v356, 0
    %v420 = vsel %vm391, %v357, 0
    %v423 = vsel %vm391, %v358, 0
    %v426 = vsel %vm391, %v359, 0
    %v429 = vsel %vm391, %v360, 0
    %v432 = vsel %vm391, %v361, 0
    %v435 = vsel %vm391, %v362, 0
    %v438 = vsel %vm391, %v363, 0
    %v441 = vsel %vm391, %v364, 0
    %v444 = vsel %vm391, %v365, 0
    %v447 = vsel %vm391, %v366, 0
    %v450 = vsel %vm391, %v367, 0
    %v453 = vsel %vm391, %v368, 0
    %v456 = vsel %vm391, %v369, 0
    %v459 = vsel %vm391, %v370, 0
    %v462 = vsel %vm391, %v371, 0
    %v465 = vsel %vm391, %v372, 0
    %v468 = vsel %vm391, %v373, 0
    %v471 = vsel %vm391, %v374, 0
    %v474 = vsel %vm391, %v375, 0
    %v477 = vsel %vm391, %v376, 0
    %v480 = vsel %vm391, %v377, 0
    %v483 = vsel %vm391, %v378, 0
    %v486 = vsel %vm391, %v379, 0
    %vm488 = vcmask 1044480
    %vm489 = vcmask 1045504
    %v490 = vsel %vm488, 4294967295, 65535
    %v491 = vsel %vm489, %v490, 0
    %v493 = vand.u32 %v389, %v491
    %495 = vmatprep.subr.bf16.mxu0 0
    %496 = vmatpush1.bf16.msra.mxu0 %v388
    %497 = vmatprep.subr.bf16.mxu0 0
    %498 = vmatpush1.bf16.msra.mxu0 %v493
    %499 = vmatprep.subr.bf16.mxu0 0
    %500 = vmatpush1.bf16.msra.mxu0 0
    %501 = vmatprep.subr.bf16.mxu0 0
    %502 = vmatpush1.bf16.msra.mxu0 0
    %503 = vmatprep.subr.bf16.mxu0 0
    %504 = vmatpush1.bf16.msra.mxu0 0
    %505 = vmatprep.subr.bf16.mxu0 0
    %506 = vmatpush1.bf16.msra.mxu0 0
    %507 = vmatprep.subr.bf16.mxu0 0
    %508 = vmatpush1.bf16.msra.mxu0 0
    %509 = vmatprep.subr.bf16.mxu0 0
    %510 = vmatpush1.bf16.msra.mxu0 0
    %511 = vmatprep.subr.bf16.mxu0 0
    %512 = vmatpush1.bf16.msra.mxu0 0
    %513 = vmatprep.subr.bf16.mxu0 0
    %514 = vmatpush1.bf16.msra.mxu0 0
    %515 = vmatprep.subr.bf16.mxu0 0
    %516 = vmatpush1.bf16.msra.mxu0 0
    %517 = vmatprep.subr.bf16.mxu0 0
    %518 = vmatpush1.bf16.msra.mxu0 0
    %519 = vmatprep.subr.bf16.mxu0 0
    %520 = vmatpush1.bf16.msra.mxu0 0
    %521 = vmatprep.subr.bf16.mxu0 0
    %522 = vmatpush1.bf16.msra.mxu0 0
    %523 = vmatprep.subr.bf16.mxu0 0
    %524 = vmatpush1.bf16.msra.mxu0 0
    %525 = vmatprep.subr.bf16.mxu0 0
    %526 = vmatpush1.bf16.msra.mxu0 0
    %527 = vmatprep.mubr.bf16.mxu0 0
    %528 = vmatmul.mubr.bf16.gmra.mrb[0].mxu0 %v393
    %v529 = vpop.f32.mrb[0].mxu0
    %v530 = vadd.f32 0.0, %v529
    %v531 = vpop.f32.mrb[0].mxu0
    %v532 = vpop.f32.mrb[0].mxu0
    %v533 = vadd.f32 0.0, %v532
    %v534 = vpop.f32.mrb[0].mxu0
    %535 = vmatprep.mubr.bf16.mxu0 0
    %536 = vmatmul.mubr.bf16.gmra.mrb[0].mxu0 %v396
    %v537 = vpop.f32.mrb[0].mxu0
    %v538 = vadd.f32 0.0, %v537
    %v539 = vpop.f32.mrb[0].mxu0
    %v540 = vpop.f32.mrb[0].mxu0
    %v541 = vadd.f32 0.0, %v540
    %v542 = vpop.f32.mrb[0].mxu0
    %543 = vmatprep.mubr.bf16.mxu0 0
    %544 = vmatmul.mubr.bf16.gmra.mrb[0].mxu0 %v399
    %v545 = vpop.f32.mrb[0].mxu0
    %v546 = vadd.f32 0.0, %v545
    %v547 = vpop.f32.mrb[0].mxu0
    %v548 = vpop.f32.mrb[0].mxu0
    %v549 = vadd.f32 0.0, %v548
    %v550 = vpop.f32.mrb[0].mxu0
    %551 = vmatprep.mubr.bf16.mxu0 0
    %552 = vmatmul.mubr.bf16.gmra.mrb[0].mxu0 %v402
    %v553 = vpop.f32.mrb[0].mxu0
    %v554 = vadd.f32 0.0, %v553
    %v555 = vpop.f32.mrb[0].mxu0
    %v556 = vpop.f32.mrb[0].mxu0
    %v557 = vadd.f32 0.0, %v556
    %v558 = vpop.f32.mrb[0].mxu0
    %559 = vmatprep.mubr.bf16.mxu0 0
    %560 = vmatmul.mubr.bf16.gmra.mrb[0].mxu0 %v405
    %v561 = vpop.f32.mrb[0].mxu0
    %v562 = vadd.f32 0.0, %v561
    %v563 = vpop.f32.mrb[0].mxu0
    %v564 = vpop.f32.mrb[0].mxu0
    %v565 = vadd.f32 0.0, %v564
    %v566 = vpop.f32.mrb[0].mxu0
    %567 = vmatprep.mubr.bf16.mxu0 0
    %568 = vmatmul.mubr.bf16.gmra.mrb[0].mxu0 %v408
    %v569 = vpop.f32.mrb[0].mxu0
    %v570 = vadd.f32 0.0, %v569
    %v571 = vpop.f32.mrb[0].mxu0
    %v572 = vpop.f32.mrb[0].mxu0
    %v573 = vadd.f32 0.0, %v572
    %v574 = vpop.f32.mrb[0].mxu0
    %575 = vmatprep.mubr.bf16.mxu0 0
    %576 = vmatmul.mubr.bf16.gmra.mrb[0].mxu0 %v411
    %v577 = vpop.f32.mrb[0].mxu0
    %v578 = vadd.f32 0.0, %v577
    %v579 = vpop.f32.mrb[0].mxu0
    %v580 = vpop.f32.mrb[0].mxu0
    %v581 = vadd.f32 0.0, %v580
    %v582 = vpop.f32.mrb[0].mxu0
    %583 = vmatprep.mubr.bf16.mxu0 0
    %584 = vmatmul.mubr.bf16.gmra.mrb[0].mxu0 %v414
    %v585 = vpop.f32.mrb[0].mxu0
    %v586 = vadd.f32 0.0, %v585
    %v587 = vpop.f32.mrb[0].mxu0
    %v588 = vpop.f32.mrb[0].mxu0
    %v589 = vadd.f32 0.0, %v588
    %v590 = vpop.f32.mrb[0].mxu0
    %591 = vmatprep.mubr.bf16.mxu0 0
    %592 = vmatmul.mubr.bf16.gmra.mrb[0].mxu0 %v417
    %v593 = vpop.f32.mrb[0].mxu0
    %v594 = vadd.f32 0.0, %v593
    %v595 = vpop.f32.mrb[0].mxu0
    %v596 = vpop.f32.mrb[0].mxu0
    %v597 = vadd.f32 0.0, %v596
    %v598 = vpop.f32.mrb[0].mxu0
    %599 = vmatprep.mubr.bf16.mxu0 0
    %600 = vmatmul.mubr.bf16.gmra.mrb[0].mxu0 %v420
    %v601 = vpop.f32.mrb[0].mxu0
    %v602 = vadd.f32 0.0, %v601
    %v603 = vpop.f32.mrb[0].mxu0
    %v604 = vpop.f32.mrb[0].mxu0
    %v605 = vadd.f32 0.0, %v604
    %v606 = vpop.f32.mrb[0].mxu0
    %607 = vmatprep.mubr.bf16.mxu0 0
    %608 = vmatmul.mubr.bf16.gmra.mrb[0].mxu0 %v423
    %v609 = vpop.f32.mrb[0].mxu0
    %v610 = vadd.f32 0.0, %v609
    %v611 = vpop.f32.mrb[0].mxu0
    %v612 = vpop.f32.mrb[0].mxu0
    %v613 = vadd.f32 0.0, %v612
    %v614 = vpop.f32.mrb[0].mxu0
    %615 = vmatprep.mubr.bf16.mxu0 0
    %616 = vmatmul.mubr.bf16.gmra.mrb[0].mxu0 %v426
    %v617 = vpop.f32.mrb[0].mxu0
    %v618 = vadd.f32 0.0, %v617
    %v619 = vpop.f32.mrb[0].mxu0
    %v620 = vpop.f32.mrb[0].mxu0
    %v621 = vadd.f32 0.0, %v620
    %v622 = vpop.f32.mrb[0].mxu0
    %623 = vmatprep.mubr.bf16.mxu0 0
    %624 = vmatmul.mubr.bf16.gmra.mrb[0].mxu0 %v429
    %v625 = vpop.f32.mrb[0].mxu0
    %v626 = vadd.f32 0.0, %v625
    %v627 = vpop.f32.mrb[0].mxu0
    %v628 = vpop.f32.mrb[0].mxu0
    %v629 = vadd.f32 0.0, %v628
    %v630 = vpop.f32.mrb[0].mxu0
    %631 = vmatprep.mubr.bf16.mxu0 0
    %632 = vmatmul.mubr.bf16.gmra.mrb[0].mxu0 %v432
    %v633 = vpop.f32.mrb[0].mxu0
    %v634 = vadd.f32 0.0, %v633
    %v635 = vpop.f32.mrb[0].mxu0
    %v636 = vpop.f32.mrb[0].mxu0
    %v637 = vadd.f32 0.0, %v636
    %v638 = vpop.f32.mrb[0].mxu0
    %639 = vmatprep.mubr.bf16.mxu0 0
    %640 = vmatmul.mubr.bf16.gmra.mrb[0].mxu0 %v435
    %v641 = vpop.f32.mrb[0].mxu0
    %v642 = vadd.f32 0.0, %v641
    %v643 = vpop.f32.mrb[0].mxu0
    %v644 = vpop.f32.mrb[0].mxu0
    %v645 = vadd.f32 0.0, %v644
    %v646 = vpop.f32.mrb[0].mxu0
    %647 = vmatprep.mubr.bf16.mxu0 0
    %648 = vmatmul.mubr.bf16.gmra.mrb[0].mxu0 %v438
    %v649 = vpop.f32.mrb[0].mxu0
    %v650 = vadd.f32 0.0, %v649
    %v651 = vpop.f32.mrb[0].mxu0
    %v652 = vpop.f32.mrb[0].mxu0
    %v653 = vadd.f32 0.0, %v652
    %v654 = vpop.f32.mrb[0].mxu0
    %655 = vmatprep.mubr.bf16.mxu0 0
    %656 = vmatmul.mubr.bf16.gmra.mrb[0].mxu0 %v441
    %v657 = vpop.f32.mrb[0].mxu0
    %v658 = vadd.f32 0.0, %v657
    %v659 = vpop.f32.mrb[0].mxu0
    %v660 = vpop.f32.mrb[0].mxu0
    %v661 = vadd.f32 0.0, %v660
    %v662 = vpop.f32.mrb[0].mxu0
    %663 = vmatprep.mubr.bf16.mxu0 0
    %664 = vmatmul.mubr.bf16.gmra.mrb[0].mxu0 %v444
    %v665 = vpop.f32.mrb[0].mxu0
    %v666 = vadd.f32 0.0, %v665
    %v667 = vpop.f32.mrb[0].mxu0
    %v668 = vpop.f32.mrb[0].mxu0
    %v669 = vadd.f32 0.0, %v668
    %v670 = vpop.f32.mrb[0].mxu0
    %671 = vmatprep.mubr.bf16.mxu0 0
    %672 = vmatmul.mubr.bf16.gmra.mrb[0].mxu0 %v447
    %v673 = vpop.f32.mrb[0].mxu0
    %v674 = vadd.f32 0.0, %v673
    %v675 = vpop.f32.mrb[0].mxu0
    %v676 = vpop.f32.mrb[0].mxu0
    %v677 = vadd.f32 0.0, %v676
    %v678 = vpop.f32.mrb[0].mxu0
    %679 = vmatprep.mubr.bf16.mxu0 0
    %680 = vmatmul.mubr.bf16.gmra.mrb[0].mxu0 %v450
    %v681 = vpop.f32.mrb[0].mxu0
    %v682 = vadd.f32 0.0, %v681
    %v683 = vpop.f32.mrb[0].mxu0
    %v684 = vpop.f32.mrb[0].mxu0
    %v685 = vadd.f32 0.0, %v684
    %v686 = vpop.f32.mrb[0].mxu0
    %687 = vmatprep.mubr.bf16.mxu0 0
    %688 = vmatmul.mubr.bf16.gmra.mrb[0].mxu0 %v453
    %v689 = vpop.f32.mrb[0].mxu0
    %v690 = vadd.f32 0.0, %v689
    %v691 = vpop.f32.mrb[0].mxu0
    %v692 = vpop.f32.mrb[0].mxu0
    %v693 = vadd.f32 0.0, %v692
    %v694 = vpop.f32.mrb[0].mxu0
    %695 = vmatprep.mubr.bf16.mxu0 0
    %696 = vmatmul.mubr.bf16.gmra.mrb[0].mxu0 %v456
    %v697 = vpop.f32.mrb[0].mxu0
    %v698 = vadd.f32 0.0, %v697
    %v699 = vpop.f32.mrb[0].mxu0
    %v700 = vpop.f32.mrb[0].mxu0
    %v701 = vadd.f32 0.0, %v700
    %v702 = vpop.f32.mrb[0].mxu0
    %703 = vmatprep.mubr.bf16.mxu0 0
    %704 = vmatmul.mubr.bf16.gmra.mrb[0].mxu0 %v459
    %v705 = vpop.f32.mrb[0].mxu0
    %v706 = vadd.f32 0.0, %v705
    %v707 = vpop.f32.mrb[0].mxu0
    %v708 = vpop.f32.mrb[0].mxu0
    %v709 = vadd.f32 0.0, %v708
    %v710 = vpop.f32.mrb[0].mxu0
    %711 = vmatprep.mubr.bf16.mxu0 0
    %712 = vmatmul.mubr.bf16.gmra.mrb[0].mxu0 %v462
    %v713 = vpop.f32.mrb[0].mxu0
    %v714 = vadd.f32 0.0, %v713
    %v715 = vpop.f32.mrb[0].mxu0
    %v716 = vpop.f32.mrb[0].mxu0
    %v717 = vadd.f32 0.0, %v716
    %v718 = vpop.f32.mrb[0].mxu0
    %719 = vmatprep.mubr.bf16.mxu0 0
    %720 = vmatmul.mubr.bf16.gmra.mrb[0].mxu0 %v465
    %v721 = vpop.f32.mrb[0].mxu0
    %v722 = vadd.f32 0.0, %v721
    %v723 = vpop.f32.mrb[0].mxu0
    %v724 = vpop.f32.mrb[0].mxu0
    %v725 = vadd.f32 0.0, %v724
    %v726 = vpop.f32.mrb[0].mxu0
    %727 = vmatprep.mubr.bf16.mxu0 0
    %728 = vmatmul.mubr.bf16.gmra.mrb[0].mxu0 %v468
    %v729 = vpop.f32.mrb[0].mxu0
    %v730 = vadd.f32 0.0, %v729
    %v731 = vpop.f32.mrb[0].mxu0
    %v732 = vpop.f32.mrb[0].mxu0
    %v733 = vadd.f32 0.0, %v732
    %v734 = vpop.f32.mrb[0].mxu0
    %735 = vmatprep.mubr.bf16.mxu0 0
    %736 = vmatmul.mubr.bf16.gmra.mrb[0].mxu0 %v471
    %v737 = vpop.f32.mrb[0].mxu0
    %v738 = vadd.f32 0.0, %v737
    %v739 = vpop.f32.mrb[0].mxu0
    %v740 = vpop.f32.mrb[0].mxu0
    %v741 = vadd.f32 0.0, %v740
    %v742 = vpop.f32.mrb[0].mxu0
    %743 = vmatprep.mubr.bf16.mxu0 0
    %744 = vmatmul.mubr.bf16.gmra.mrb[0].mxu0 %v474
    %v745 = vpop.f32.mrb[0].mxu0
    %v746 = vadd.f32 0.0, %v745
    %v747 = vpop.f32.mrb[0].mxu0
    %v748 = vpop.f32.mrb[0].mxu0
    %v749 = vadd.f32 0.0, %v748
    %v750 = vpop.f32.mrb[0].mxu0
    %751 = vmatprep.mubr.bf16.mxu0 0
    %752 = vmatmul.mubr.bf16.gmra.mrb[0].mxu0 %v477
    %v753 = vpop.f32.mrb[0].mxu0
    %v754 = vadd.f32 0.0, %v753
    %v755 = vpop.f32.mrb[0].mxu0
    %v756 = vpop.f32.mrb[0].mxu0
    %v757 = vadd.f32 0.0, %v756
    %v758 = vpop.f32.mrb[0].mxu0
    %759 = vmatprep.mubr.bf16.mxu0 0
    %760 = vmatmul.mubr.bf16.gmra.mrb[0].mxu0 %v480
    %v761 = vpop.f32.mrb[0].mxu0
    %v762 = vadd.f32 0.0, %v761
    %v763 = vpop.f32.mrb[0].mxu0
    %v764 = vpop.f32.mrb[0].mxu0
    %v765 = vadd.f32 0.0, %v764
    %v766 = vpop.f32.mrb[0].mxu0
    %767 = vmatprep.mubr.bf16.mxu0 0
    %768 = vmatmul.mubr.bf16.gmra.mrb[0].mxu0 %v483
    %v769 = vpop.f32.mrb[0].mxu0
    %v770 = vadd.f32 0.0, %v769
    %v771 = vpop.f32.mrb[0].mxu0
    %v772 = vpop.f32.mrb[0].mxu0
    %v773 = vadd.f32 0.0, %v772
    %v774 = vpop.f32.mrb[0].mxu0
    %775 = vmatprep.mubr.bf16.mxu0 0
    %776 = vmatmul.mubr.bf16.gmra.mrb[0].mxu0 %v486
    %v777 = vpop.f32.mrb[0].mxu0
    %v778 = vadd.f32 0.0, %v777
    %v779 = vpop.f32.mrb[0].mxu0
    %v780 = vpop.f32.mrb[0].mxu0
    %v781 = vadd.f32 0.0, %v780
    %v782 = vpop.f32.mrb[0].mxu0
    %783 = vdwg.mxu0
    %v784 = vadd.f32 %v88, %v530
    %v785 = vadd.f32 %v89, %v533
    %v786 = vadd.f32 %v90, %v538
    %v787 = vadd.f32 %v91, %v541
    %v788 = vadd.f32 %v92, %v546
    %v789 = vadd.f32 %v93, %v549
    %v790 = vadd.f32 %v94, %v554
    %v791 = vadd.f32 %v95, %v557
    %v792 = vadd.f32 %v96, %v562
    %v793 = vadd.f32 %v97, %v565
    %v794 = vadd.f32 %v98, %v570
    %v795 = vadd.f32 %v99, %v573
    %v796 = vadd.f32 %v100, %v578
    %v797 = vadd.f32 %v101, %v581
    %v798 = vadd.f32 %v102, %v586
    %v799 = vadd.f32 %v103, %v589
    %v800 = vadd.f32 %v104, %v594
    %v801 = vadd.f32 %v105, %v597
    %v802 = vadd.f32 %v106, %v602
    %v803 = vadd.f32 %v107, %v605
    %v804 = vadd.f32 %v108, %v610
    %v805 = vadd.f32 %v109, %v613
    %v806 = vadd.f32 %v110, %v618
    %v807 = vadd.f32 %v111, %v621
    %v808 = vadd.f32 %v112, %v626
    %v809 = vadd.f32 %v113, %v629
    %v810 = vadd.f32 %v114, %v634
    %v811 = vadd.f32 %v115, %v637
    %v812 = vadd.f32 %v116, %v642
    %v813 = vadd.f32 %v117, %v645
    %v814 = vadd.f32 %v118, %v650
    %v815 = vadd.f32 %v119, %v653
    %v816 = vadd.f32 %v120, %v658
    %v817 = vadd.f32 %v121, %v661
    %v818 = vadd.f32 %v122, %v666
    %v819 = vadd.f32 %v123, %v669
    %v820 = vadd.f32 %v124, %v674
    %v821 = vadd.f32 %v125, %v677
    %v822 = vadd.f32 %v126, %v682
    %v823 = vadd.f32 %v127, %v685
    %v824 = vadd.f32 %v128, %v690
    %v825 = vadd.f32 %v129, %v693
    %v826 = vadd.f32 %v130, %v698
    %v827 = vadd.f32 %v131, %v701
    %v828 = vadd.f32 %v132, %v706
    %v829 = vadd.f32 %v133, %v709
    %v830 = vadd.f32 %v134, %v714
    %v831 = vadd.f32 %v135, %v717
    %v832 = vadd.f32 %v136, %v722
    %v833 = vadd.f32 %v137, %v725
    %v834 = vadd.f32 %v138, %v730
    %v835 = vadd.f32 %v139, %v733
    %v836 = vadd.f32 %v140, %v738
    %v837 = vadd.f32 %v141, %v741
    %v838 = vadd.f32 %v142, %v746
    %v839 = vadd.f32 %v143, %v749
    %v840 = vadd.f32 %v144, %v754
    %v841 = vadd.f32 %v145, %v757
    %v842 = vadd.f32 %v146, %v762
    %v843 = vadd.f32 %v147, %v765
    %v844 = vadd.f32 %v148, %v770
    %v845 = vadd.f32 %v149, %v773
    %v846 = vadd.f32 %v150, %v778
    %v847 = vadd.f32 %v151, %v781
    %vm848 = vcmask 523264
    %849 = vst.msk [vmem:[#allocation2] sm:$0xff] %vm848, %v784
    %850 = vst.msk [vmem:[#allocation2 + $0x8] sm:$0xff] %vm848, %v785
    %851 = vst.msk [vmem:[#allocation2 + $0x10] sm:$0xff] %vm848, %v786
    %852 = vst.msk [vmem:[#allocation2 + $0x18] sm:$0xff] %vm848, %v787
    %853 = vst.msk [vmem:[#allocation2 + $0x20] sm:$0xff] %vm848, %v788
    %854 = vst.msk [vmem:[#allocation2 + $0x28] sm:$0xff] %vm848, %v789
    %855 = vst.msk [vmem:[#allocation2 + $0x30] sm:$0xff] %vm848, %v790
    %856 = vst.msk [vmem:[#allocation2 + $0x38] sm:$0xff] %vm848, %v791
    %857 = vst.msk [vmem:[#allocation2 + $0x40] sm:$0xff] %vm848, %v792
    %858 = vst.msk [vmem:[#allocation2 + $0x48] sm:$0xff] %vm848, %v793
    %859 = vst.msk [vmem:[#allocation2 + $0x50] sm:$0xff] %vm848, %v794
    %860 = vst.msk [vmem:[#allocation2 + $0x58] sm:$0xff] %vm848, %v795
    %861 = vst.msk [vmem:[#allocation2 + $0x60] sm:$0xff] %vm848, %v796
    %862 = vst.msk [vmem:[#allocation2 + $0x68] sm:$0xff] %vm848, %v797
    %863 = vst.msk [vmem:[#allocation2 + $0x70] sm:$0xff] %vm848, %v798
    %864 = vst.msk [vmem:[#allocation2 + $0x78] sm:$0xff] %vm848, %v799
    %865 = vst.msk [vmem:[#allocation2 + $0x80] sm:$0xff] %vm848, %v800
    %866 = vst.msk [vmem:[#allocation2 + $0x88] sm:$0xff] %vm848, %v801
    %867 = vst.msk [vmem:[#allocation2 + $0x90] sm:$0xff] %vm848, %v802
    %868 = vst.msk [vmem:[#allocation2 + $0x98] sm:$0xff] %vm848, %v803
    %869 = vst.msk [vmem:[#allocation2 + $0xa0] sm:$0xff] %vm848, %v804
    %870 = vst.msk [vmem:[#allocation2 + $0xa8] sm:$0xff] %vm848, %v805
    %871 = vst.msk [vmem:[#allocation2 + $0xb0] sm:$0xff] %vm848, %v806
    %872 = vst.msk [vmem:[#allocation2 + $0xb8] sm:$0xff] %vm848, %v807
    %873 = vst.msk [vmem:[#allocation2 + $0xc0] sm:$0xff] %vm848, %v808
    %874 = vst.msk [vmem:[#allocation2 + $0xc8] sm:$0xff] %vm848, %v809
    %875 = vst.msk [vmem:[#allocation2 + $0xd0] sm:$0xff] %vm848, %v810
    %876 = vst.msk [vmem:[#allocation2 + $0xd8] sm:$0xff] %vm848, %v811
    %877 = vst.msk [vmem:[#allocation2 + $0xe0] sm:$0xff] %vm848, %v812
    %878 = vst.msk [vmem:[#allocation2 + $0xe8] sm:$0xff] %vm848, %v813
    %879 = vst.msk [vmem:[#allocation2 + $0xf0] sm:$0xff] %vm848, %v814
    %880 = vst.msk [vmem:[#allocation2 + $0xf8] sm:$0xff] %vm848, %v815
    %881 = vst.msk [vmem:[#allocation2 + $0x100] sm:$0xff] %vm848, %v816
    %882 = vst.msk [vmem:[#allocation2 + $0x108] sm:$0xff] %vm848, %v817
    %883 = vst.msk [vmem:[#allocation2 + $0x110] sm:$0xff] %vm848, %v818
    %884 = vst.msk [vmem:[#allocation2 + $0x118] sm:$0xff] %vm848, %v819
    %885 = vst.msk [vmem:[#allocation2 + $0x120] sm:$0xff] %vm848, %v820
    %886 = vst.msk [vmem:[#allocation2 + $0x128] sm:$0xff] %vm848, %v821
    %887 = vst.msk [vmem:[#allocation2 + $0x130] sm:$0xff] %vm848, %v822
    %888 = vst.msk [vmem:[#allocation2 + $0x138] sm:$0xff] %vm848, %v823
    %889 = vst.msk [vmem:[#allocation2 + $0x140] sm:$0xff] %vm848, %v824
    %890 = vst.msk [vmem:[#allocation2 + $0x148] sm:$0xff] %vm848, %v825
    %891 = vst.msk [vmem:[#allocation2 + $0x150] sm:$0xff] %vm848, %v826
    %892 = vst.msk [vmem:[#allocation2 + $0x158] sm:$0xff] %vm848, %v827
    %893 = vst.msk [vmem:[#allocation2 + $0x160] sm:$0xff] %vm848, %v828
    %894 = vst.msk [vmem:[#allocation2 + $0x168] sm:$0xff] %vm848, %v829
    %895 = vst.msk [vmem:[#allocation2 + $0x170] sm:$0xff] %vm848, %v830
    %896 = vst.msk [vmem:[#allocation2 + $0x178] sm:$0xff] %vm848, %v831
    %897 = vst.msk [vmem:[#allocation2 + $0x180] sm:$0xff] %vm848, %v832
    %898 = vst.msk [vmem:[#allocation2 + $0x188] sm:$0xff] %vm848, %v833
    %899 = vst.msk [vmem:[#allocation2 + $0x190] sm:$0xff] %vm848, %v834
    %900 = vst.msk [vmem:[#allocation2 + $0x198] sm:$0xff] %vm848, %v835
    %901 = vst.msk [vmem:[#allocation2 + $0x1a0] sm:$0xff] %vm848, %v836
    %902 = vst.msk [vmem:[#allocation2 + $0x1a8] sm:$0xff] %vm848, %v837
    %903 = vst.msk [vmem:[#allocation2 + $0x1b0] sm:$0xff] %vm848, %v838
    %904 = vst.msk [vmem:[#allocation2 + $0x1b8] sm:$0xff] %vm848, %v839
    %905 = vst.msk [vmem:[#allocation2 + $0x1c0] sm:$0xff] %vm848, %v840
    %906 = vst.msk [vmem:[#allocation2 + $0x1c8] sm:$0xff] %vm848, %v841
    %907 = vst.msk [vmem:[#allocation2 + $0x1d0] sm:$0xff] %vm848, %v842
    %908 = vst.msk [vmem:[#allocation2 + $0x1d8] sm:$0xff] %vm848, %v843
    %909 = vst.msk [vmem:[#allocation2 + $0x1e0] sm:$0xff] %vm848, %v844
    %910 = vst.msk [vmem:[#allocation2 + $0x1e8] sm:$0xff] %vm848, %v845
    %911 = vst.msk [vmem:[#allocation2 + $0x1f0] sm:$0xff] %vm848, %v846
    %912 = vst.msk [vmem:[#allocation2 + $0x1f8] sm:$0xff] %vm848, %v847
    // Predicated region
    $region22: #{_conv_slab_nores.1} parent=1 // pred_check
      %p913 = pneg %p19
    $region23: #{_conv_slab_nores.1} parent=1 // pred_check_branch
      %915 = sbr.rel (%p913) target = $region25
    $region24: #{_conv_slab_nores.1} parent=1 // pred_region
      %v916 = vld [vmem:[#allocation2] sm:$0xff]
      %v917 = vld [vmem:[#allocation2 + $0x8] sm:$0xff]
      %v918 = vld [vmem:[#allocation2 + $0x10] sm:$0xff]
      %v919 = vld [vmem:[#allocation2 + $0x18] sm:$0xff]
      %v920 = vld [vmem:[#allocation2 + $0x20] sm:$0xff]
      %v921 = vld [vmem:[#allocation2 + $0x28] sm:$0xff]
      %v922 = vld [vmem:[#allocation2 + $0x30] sm:$0xff]
      %v923 = vld [vmem:[#allocation2 + $0x38] sm:$0xff]
      %v924 = vld [vmem:[#allocation2 + $0x40] sm:$0xff]
      %v925 = vld [vmem:[#allocation2 + $0x48] sm:$0xff]
      %v926 = vld [vmem:[#allocation2 + $0x50] sm:$0xff]
      %v927 = vld [vmem:[#allocation2 + $0x58] sm:$0xff]
      %v928 = vld [vmem:[#allocation2 + $0x60] sm:$0xff]
      %v929 = vld [vmem:[#allocation2 + $0x68] sm:$0xff]
      %v930 = vld [vmem:[#allocation2 + $0x70] sm:$0xff]
      %v931 = vld [vmem:[#allocation2 + $0x78] sm:$0xff]
      %v932 = vld [vmem:[#allocation2 + $0x80] sm:$0xff]
      %v933 = vld [vmem:[#allocation2 + $0x88] sm:$0xff]
      %v934 = vld [vmem:[#allocation2 + $0x90] sm:$0xff]
      %v935 = vld [vmem:[#allocation2 + $0x98] sm:$0xff]
      %v936 = vld [vmem:[#allocation2 + $0xa0] sm:$0xff]
      %v937 = vld [vmem:[#allocation2 + $0xa8] sm:$0xff]
      %v938 = vld [vmem:[#allocation2 + $0xb0] sm:$0xff]
      %v939 = vld [vmem:[#allocation2 + $0xb8] sm:$0xff]
      %v940 = vld [vmem:[#allocation2 + $0xc0] sm:$0xff]
      %v941 = vld [vmem:[#allocation2 + $0xc8] sm:$0xff]
      %v942 = vld [vmem:[#allocation2 + $0xd0] sm:$0xff]
      %v943 = vld [vmem:[#allocation2 + $0xd8] sm:$0xff]
      %v944 = vld [vmem:[#allocation2 + $0xe0] sm:$0xff]
      %v945 = vld [vmem:[#allocation2 + $0xe8] sm:$0xff]
      %v946 = vld [vmem:[#allocation2 + $0xf0] sm:$0xff]
      %v947 = vld [vmem:[#allocation2 + $0xf8] sm:$0xff]
      %v948 = vld [vmem:[#allocation2 + $0x100] sm:$0xff]
      %v949 = vld [vmem:[#allocation2 + $0x108] sm:$0xff]
      %v950 = vld [vmem:[#allocation2 + $0x110] sm:$0xff]
      %v951 = vld [vmem:[#allocation2 + $0x118] sm:$0xff]
      %v952 = vld [vmem:[#allocation2 + $0x120] sm:$0xff]
      %v953 = vld [vmem:[#allocation2 + $0x128] sm:$0xff]
      %v954 = vld [vmem:[#allocation2 + $0x130] sm:$0xff]
      %v955 = vld [vmem:[#allocation2 + $0x138] sm:$0xff]
      %v956 = vld [vmem:[#allocation2 + $0x140] sm:$0xff]
      %v957 = vld [vmem:[#allocation2 + $0x148] sm:$0xff]
      %v958 = vld [vmem:[#allocation2 + $0x150] sm:$0xff]
      %v959 = vld [vmem:[#allocation2 + $0x158] sm:$0xff]
      %v960 = vld [vmem:[#allocation2 + $0x160] sm:$0xff]
      %v961 = vld [vmem:[#allocation2 + $0x168] sm:$0xff]
      %v962 = vld [vmem:[#allocation2 + $0x170] sm:$0xff]
      %v963 = vld [vmem:[#allocation2 + $0x178] sm:$0xff]
      %v964 = vld [vmem:[#allocation2 + $0x180] sm:$0xff]
      %v965 = vld [vmem:[#allocation2 + $0x188] sm:$0xff]
      %v966 = vld [vmem:[#allocation2 + $0x190] sm:$0xff]
      %v967 = vld [vmem:[#allocation2 + $0x198] sm:$0xff]
      %v968 = vld [vmem:[#allocation2 + $0x1a0] sm:$0xff]
      %v969 = vld [vmem:[#allocation2 + $0x1a8] sm:$0xff]
      %v970 = vld [vmem:[#allocation2 + $0x1b0] sm:$0xff]
      %v971 = vld [vmem:[#allocation2 + $0x1b8] sm:$0xff]
      %v972 = vld [vmem:[#allocation2 + $0x1c0] sm:$0xff]
      %v973 = vld [vmem:[#allocation2 + $0x1c8] sm:$0xff]
      %v974 = vld [vmem:[#allocation2 + $0x1d0] sm:$0xff]
      %v975 = vld [vmem:[#allocation2 + $0x1d8] sm:$0xff]
      %v976 = vld [vmem:[#allocation2 + $0x1e0] sm:$0xff]
      %v977 = vld [vmem:[#allocation2 + $0x1e8] sm:$0xff]
      %v978 = vld [vmem:[#allocation2 + $0x1f0] sm:$0xff]
      %v979 = vld [vmem:[#allocation2 + $0x1f8] sm:$0xff]
      %v980 = vld [vmem:[%s2] sm:$0x1]
      %v981 = vld [vmem:[%s3] sm:$0x1]
      %v982 = vsel %vm848, %v916, 0.0
      %v983 = vsel %vm848, %v917, 0.0
      %v984 = vadd.f32 %v982, %v983
      %v985 = vsel %vm848, %v918, 0.0
      %v986 = vadd.f32 %v984, %v985
      %v987 = vsel %vm848, %v919, 0.0
      %v988 = vadd.f32 %v986, %v987
      %v989 = vsel %vm848, %v920, 0.0
      %v990 = vadd.f32 %v988, %v989
      %v991 = vsel %vm848, %v921, 0.0
      %v992 = vadd.f32 %v990, %v991
      %v993 = vsel %vm848, %v922, 0.0
      %v994 = vadd.f32 %v992, %v993
      %v995 = vsel %vm848, %v923, 0.0
      %v996 = vadd.f32 %v994, %v995
      %v997 = vsel %vm848, %v924, 0.0
      %v998 = vadd.f32 %v996, %v997
      %v999 = vsel %vm848, %v925, 0.0
      %v1000 = vadd.f32 %v998, %v999
      %v1001 = vsel %vm848, %v926, 0.0
      %v1002 = vadd.f32 %v1000, %v1001
      %v1003 = vsel %vm848, %v927, 0.0
      %v1004 = vadd.f32 %v1002, %v1003
      %v1005 = vsel %vm848, %v928, 0.0
      %v1006 = vadd.f32 %v1004, %v1005
      %v1007 = vsel %vm848, %v929, 0.0
      %v1008 = vadd.f32 %v1006, %v1007
      %v1009 = vsel %vm848, %v930, 0.0
      %v1010 = vadd.f32 %v1008, %v1009
      %v1011 = vsel %vm848, %v931, 0.0
      %v1012 = vadd.f32 %v1010, %v1011
      %v1013 = vsel %vm848, %v932, 0.0
      %v1014 = vadd.f32 %v1012, %v1013
      %v1015 = vsel %vm848, %v933, 0.0
      %v1016 = vadd.f32 %v1014, %v1015
      %v1017 = vsel %vm848, %v934, 0.0
      %v1018 = vadd.f32 %v1016, %v1017
      %v1019 = vsel %vm848, %v935, 0.0
      %v1020 = vadd.f32 %v1018, %v1019
      %v1021 = vsel %vm848, %v936, 0.0
      %v1022 = vadd.f32 %v1020, %v1021
      %v1023 = vsel %vm848, %v937, 0.0
      %v1024 = vadd.f32 %v1022, %v1023
      %v1025 = vsel %vm848, %v938, 0.0
      %v1026 = vadd.f32 %v1024, %v1025
      %v1027 = vsel %vm848, %v939, 0.0
      %v1028 = vadd.f32 %v1026, %v1027
      %v1029 = vsel %vm848, %v940, 0.0
      %v1030 = vadd.f32 %v1028, %v1029
      %v1031 = vsel %vm848, %v941, 0.0
      %v1032 = vadd.f32 %v1030, %v1031
      %v1033 = vsel %vm848, %v942, 0.0
      %v1034 = vadd.f32 %v1032, %v1033
      %v1035 = vsel %vm848, %v943, 0.0
      %v1036 = vadd.f32 %v1034, %v1035
      %v1037 = vsel %vm848, %v944, 0.0
      %v1038 = vadd.f32 %v1036, %v1037
      %v1039 = vsel %vm848, %v945, 0.0
      %v1040 = vadd.f32 %v1038, %v1039
      %v1041 = vsel %vm848, %v946, 0.0
      %v1042 = vadd.f32 %v1040, %v1041
      %v1043 = vsel %vm848, %v947, 0.0
      %v1044 = vadd.f32 %v1042, %v1043
      %v1045 = vsel %vm848, %v948, 0.0
      %v1046 = vadd.f32 %v1044, %v1045
      %v1047 = vsel %vm848, %v949, 0.0
      %v1048 = vadd.f32 %v1046, %v1047
      %v1049 = vsel %vm848, %v950, 0.0
      %v1050 = vadd.f32 %v1048, %v1049
      %v1051 = vsel %vm848, %v951, 0.0
      %v1052 = vadd.f32 %v1050, %v1051
      %v1053 = vsel %vm848, %v952, 0.0
      %v1054 = vadd.f32 %v1052, %v1053
      %v1055 = vsel %vm848, %v953, 0.0
      %v1056 = vadd.f32 %v1054, %v1055
      %v1057 = vsel %vm848, %v954, 0.0
      %v1058 = vadd.f32 %v1056, %v1057
      %v1059 = vsel %vm848, %v955, 0.0
      %v1060 = vadd.f32 %v1058, %v1059
      %v1061 = vsel %vm848, %v956, 0.0
      %v1062 = vadd.f32 %v1060, %v1061
      %v1063 = vsel %vm848, %v957, 0.0
      %v1064 = vadd.f32 %v1062, %v1063
      %v1065 = vsel %vm848, %v958, 0.0
      %v1066 = vadd.f32 %v1064, %v1065
      %v1067 = vsel %vm848, %v959, 0.0
      %v1068 = vadd.f32 %v1066, %v1067
      %v1069 = vsel %vm848, %v960, 0.0
      %v1070 = vadd.f32 %v1068, %v1069
      %v1071 = vsel %vm848, %v961, 0.0
      %v1072 = vadd.f32 %v1070, %v1071
      %v1073 = vsel %vm848, %v962, 0.0
      %v1074 = vadd.f32 %v1072, %v1073
      %v1075 = vsel %vm848, %v963, 0.0
      %v1076 = vadd.f32 %v1074, %v1075
      %v1077 = vsel %vm848, %v964, 0.0
      %v1078 = vadd.f32 %v1076, %v1077
      %v1079 = vsel %vm848, %v965, 0.0
      %v1080 = vadd.f32 %v1078, %v1079
      %v1081 = vsel %vm848, %v966, 0.0
      %v1082 = vadd.f32 %v1080, %v1081
      %v1083 = vsel %vm848, %v967, 0.0
      %v1084 = vadd.f32 %v1082, %v1083
      %v1085 = vsel %vm848, %v968, 0.0
      %v1086 = vadd.f32 %v1084, %v1085
      %v1087 = vsel %vm848, %v969, 0.0
      %v1088 = vadd.f32 %v1086, %v1087
      %v1089 = vsel %vm848, %v970, 0.0
      %v1090 = vadd.f32 %v1088, %v1089
      %v1091 = vsel %vm848, %v971, 0.0
      %v1092 = vadd.f32 %v1090, %v1091
      %v1093 = vsel %vm848, %v972, 0.0
      %v1094 = vadd.f32 %v1092, %v1093
      %v1095 = vsel %vm848, %v973, 0.0
      %v1096 = vadd.f32 %v1094, %v1095
      %v1097 = vsel %vm848, %v974, 0.0
      %v1098 = vadd.f32 %v1096, %v1097
      %v1099 = vsel %vm848, %v975, 0.0
      %v1100 = vadd.f32 %v1098, %v1099
      %v1101 = vsel %vm848, %v976, 0.0
      %v1102 = vadd.f32 %v1100, %v1101
      %v1103 = vsel %vm848, %v977, 0.0
      %v1104 = vadd.f32 %v1102, %v1103
      %v1105 = vsel %vm848, %v978, 0.0
      %v1106 = vadd.f32 %v1104, %v1105
      %v1107 = vsel %vm848, %v979, 0.0
      %v1108 = vadd.f32 %v1106, %v1107
      %v1109 = vrot.slane %v1108, 4
      %v1110 = vadd.f32 %v1108, %v1109
      %v1111 = vrot.slane %v1110, 2
      %v1112 = vadd.f32 %v1110, %v1111
      %v1113 = vrot.slane %v1112, 1
      %v1114 = vadd.f32 %v1112, %v1113
      %v1115 = vrcp.pop 512.0
      %v1116 = vmul.f32 %v1114, %v1115
      %v1117 = vsub.f32 %v916, %v1116
      %v1118 = vsub.f32 %v917, %v1116
      %v1119 = vsub.f32 %v918, %v1116
      %v1120 = vsub.f32 %v919, %v1116
      %v1121 = vsub.f32 %v920, %v1116
      %v1122 = vsub.f32 %v921, %v1116
      %v1123 = vsub.f32 %v922, %v1116
      %v1124 = vsub.f32 %v923, %v1116
      %v1125 = vsub.f32 %v924, %v1116
      %v1126 = vsub.f32 %v925, %v1116
      %v1127 = vsub.f32 %v926, %v1116
      %v1128 = vsub.f32 %v927, %v1116
      %v1129 = vsub.f32 %v928, %v1116
      %v1130 = vsub.f32 %v929, %v1116
      %v1131 = vsub.f32 %v930, %v1116
      %v1132 = vsub.f32 %v931, %v1116
      %v1133 = vsub.f32 %v932, %v1116
      %v1134 = vsub.f32 %v933, %v1116
      %v1135 = vsub.f32 %v934, %v1116
      %v1136 = vsub.f32 %v935, %v1116
      %v1137 = vsub.f32 %v936, %v1116
      %v1138 = vsub.f32 %v937, %v1116
      %v1139 = vsub.f32 %v938, %v1116
      %v1140 = vsub.f32 %v939, %v1116
      %v1141 = vsub.f32 %v940, %v1116
      %v1142 = vsub.f32 %v941, %v1116
      %v1143 = vsub.f32 %v942, %v1116
      %v1144 = vsub.f32 %v943, %v1116
      %v1145 = vsub.f32 %v944, %v1116
      %v1146 = vsub.f32 %v945, %v1116
      %v1147 = vsub.f32 %v946, %v1116
      %v1148 = vsub.f32 %v947, %v1116
      %v1149 = vsub.f32 %v948, %v1116
      %v1150 = vsub.f32 %v949, %v1116
      %v1151 = vsub.f32 %v950, %v1116
      %v1152 = vsub.f32 %v951, %v1116
      %v1153 = vsub.f32 %v952, %v1116
      %v1154 = vsub.f32 %v953, %v1116
      %v1155 = vsub.f32 %v954, %v1116
      %v1156 = vsub.f32 %v955, %v1116
      %v1157 = vsub.f32 %v956, %v1116
      %v1158 = vsub.f32 %v957, %v1116
      %v1159 = vsub.f32 %v958, %v1116
      %v1160 = vsub.f32 %v959, %v1116
      %v1161 = vsub.f32 %v960, %v1116
      %v1162 = vsub.f32 %v961, %v1116
      %v1163 = vsub.f32 %v962, %v1116
      %v1164 = vsub.f32 %v963, %v1116
      %v1165 = vsub.f32 %v964, %v1116
      %v1166 = vsub.f32 %v965, %v1116
      %v1167 = vsub.f32 %v966, %v1116
      %v1168 = vsub.f32 %v967, %v1116
      %v1169 = vsub.f32 %v968, %v1116
      %v1170 = vsub.f32 %v969, %v1116
      %v1171 = vsub.f32 %v970, %v1116
      %v1172 = vsub.f32 %v971, %v1116
      %v1173 = vsub.f32 %v972, %v1116
      %v1174 = vsub.f32 %v973, %v1116
      %v1175 = vsub.f32 %v974, %v1116
      %v1176 = vsub.f32 %v975, %v1116
      %v1177 = vsub.f32 %v976, %v1116
      %v1178 = vsub.f32 %v977, %v1116
      %v1179 = vsub.f32 %v978, %v1116
      %v1180 = vsub.f32 %v979, %v1116
      %v1181 = vmul.f32 %v1117, %v1117
      %v1182 = vmul.f32 %v1118, %v1118
      %v1183 = vmul.f32 %v1119, %v1119
      %v1184 = vmul.f32 %v1120, %v1120
      %v1185 = vmul.f32 %v1121, %v1121
      %v1186 = vmul.f32 %v1122, %v1122
      %v1187 = vmul.f32 %v1123, %v1123
      %v1188 = vmul.f32 %v1124, %v1124
      %v1189 = vmul.f32 %v1125, %v1125
      %v1190 = vmul.f32 %v1126, %v1126
      %v1191 = vmul.f32 %v1127, %v1127
      %v1192 = vmul.f32 %v1128, %v1128
      %v1193 = vmul.f32 %v1129, %v1129
      %v1194 = vmul.f32 %v1130, %v1130
      %v1195 = vmul.f32 %v1131, %v1131
      %v1196 = vmul.f32 %v1132, %v1132
      %v1197 = vmul.f32 %v1133, %v1133
      %v1198 = vmul.f32 %v1134, %v1134
      %v1199 = vmul.f32 %v1135, %v1135
      %v1200 = vmul.f32 %v1136, %v1136
      %v1201 = vmul.f32 %v1137, %v1137
      %v1202 = vmul.f32 %v1138, %v1138
      %v1203 = vmul.f32 %v1139, %v1139
      %v1204 = vmul.f32 %v1140, %v1140
      %v1205 = vmul.f32 %v1141, %v1141
      %v1206 = vmul.f32 %v1142, %v1142
      %v1207 = vmul.f32 %v1143, %v1143
      %v1208 = vmul.f32 %v1144, %v1144
      %v1209 = vmul.f32 %v1145, %v1145
      %v1210 = vmul.f32 %v1146, %v1146
      %v1211 = vmul.f32 %v1147, %v1147
      %v1212 = vmul.f32 %v1148, %v1148
      %v1213 = vmul.f32 %v1149, %v1149
      %v1214 = vmul.f32 %v1150, %v1150
      %v1215 = vmul.f32 %v1151, %v1151
      %v1216 = vmul.f32 %v1152, %v1152
      %v1217 = vmul.f32 %v1153, %v1153
      %v1218 = vmul.f32 %v1154, %v1154
      %v1219 = vmul.f32 %v1155, %v1155
      %v1220 = vmul.f32 %v1156, %v1156
      %v1221 = vmul.f32 %v1157, %v1157
      %v1222 = vmul.f32 %v1158, %v1158
      %v1223 = vmul.f32 %v1159, %v1159
      %v1224 = vmul.f32 %v1160, %v1160
      %v1225 = vmul.f32 %v1161, %v1161
      %v1226 = vmul.f32 %v1162, %v1162
      %v1227 = vmul.f32 %v1163, %v1163
      %v1228 = vmul.f32 %v1164, %v1164
      %v1229 = vmul.f32 %v1165, %v1165
      %v1230 = vmul.f32 %v1166, %v1166
      %v1231 = vmul.f32 %v1167, %v1167
      %v1232 = vmul.f32 %v1168, %v1168
      %v1233 = vmul.f32 %v1169, %v1169
      %v1234 = vmul.f32 %v1170, %v1170
      %v1235 = vmul.f32 %v1171, %v1171
      %v1236 = vmul.f32 %v1172, %v1172
      %v1237 = vmul.f32 %v1173, %v1173
      %v1238 = vmul.f32 %v1174, %v1174
      %v1239 = vmul.f32 %v1175, %v1175
      %v1240 = vmul.f32 %v1176, %v1176
      %v1241 = vmul.f32 %v1177, %v1177
      %v1242 = vmul.f32 %v1178, %v1178
      %v1243 = vmul.f32 %v1179, %v1179
      %v1244 = vmul.f32 %v1180, %v1180
      %v1245 = vsel %vm848, %v1181, 0.0
      %v1246 = vsel %vm848, %v1182, 0.0
      %v1247 = vadd.f32 %v1245, %v1246
      %v1248 = vsel %vm848, %v1183, 0.0
      %v1249 = vadd.f32 %v1247, %v1248
      %v1250 = vsel %vm848, %v1184, 0.0
      %v1251 = vadd.f32 %v1249, %v1250
      %v1252 = vsel %vm848, %v1185, 0.0
      %v1253 = vadd.f32 %v1251, %v1252
      %v1254 = vsel %vm848, %v1186, 0.0
      %v1255 = vadd.f32 %v1253, %v1254
      %v1256 = vsel %vm848, %v1187, 0.0
      %v1257 = vadd.f32 %v1255, %v1256
      %v1258 = vsel %vm848, %v1188, 0.0
      %v1259 = vadd.f32 %v1257, %v1258
      %v1260 = vsel %vm848, %v1189, 0.0
      %v1261 = vadd.f32 %v1259, %v1260
      %v1262 = vsel %vm848, %v1190, 0.0
      %v1263 = vadd.f32 %v1261, %v1262
      %v1264 = vsel %vm848, %v1191, 0.0
      %v1265 = vadd.f32 %v1263, %v1264
      %v1266 = vsel %vm848, %v1192, 0.0
      %v1267 = vadd.f32 %v1265, %v1266
      %v1268 = vsel %vm848, %v1193, 0.0
      %v1269 = vadd.f32 %v1267, %v1268
      %v1270 = vsel %vm848, %v1194, 0.0
      %v1271 = vadd.f32 %v1269, %v1270
      %v1272 = vsel %vm848, %v1195, 0.0
      %v1273 = vadd.f32 %v1271, %v1272
      %v1274 = vsel %vm848, %v1196, 0.0
      %v1275 = vadd.f32 %v1273, %v1274
      %v1276 = vsel %vm848, %v1197, 0.0
      %v1277 = vadd.f32 %v1275, %v1276
      %v1278 = vsel %vm848, %v1198, 0.0
      %v1279 = vadd.f32 %v1277, %v1278
      %v1280 = vsel %vm848, %v1199, 0.0
      %v1281 = vadd.f32 %v1279, %v1280
      %v1282 = vsel %vm848, %v1200, 0.0
      %v1283 = vadd.f32 %v1281, %v1282
      %v1284 = vsel %vm848, %v1201, 0.0
      %v1285 = vadd.f32 %v1283, %v1284
      %v1286 = vsel %vm848, %v1202, 0.0
      %v1287 = vadd.f32 %v1285, %v1286
      %v1288 = vsel %vm848, %v1203, 0.0
      %v1289 = vadd.f32 %v1287, %v1288
      %v1290 = vsel %vm848, %v1204, 0.0
      %v1291 = vadd.f32 %v1289, %v1290
      %v1292 = vsel %vm848, %v1205, 0.0
      %v1293 = vadd.f32 %v1291, %v1292
      %v1294 = vsel %vm848, %v1206, 0.0
      %v1295 = vadd.f32 %v1293, %v1294
      %v1296 = vsel %vm848, %v1207, 0.0
      %v1297 = vadd.f32 %v1295, %v1296
      %v1298 = vsel %vm848, %v1208, 0.0
      %v1299 = vadd.f32 %v1297, %v1298
      %v1300 = vsel %vm848, %v1209, 0.0
      %v1301 = vadd.f32 %v1299, %v1300
      %v1302 = vsel %vm848, %v1210, 0.0
      %v1303 = vadd.f32 %v1301, %v1302
      %v1304 = vsel %vm848, %v1211, 0.0
      %v1305 = vadd.f32 %v1303, %v1304
      %v1306 = vsel %vm848, %v1212, 0.0
      %v1307 = vadd.f32 %v1305, %v1306
      %v1308 = vsel %vm848, %v1213, 0.0
      %v1309 = vadd.f32 %v1307, %v1308
      %v1310 = vsel %vm848, %v1214, 0.0
      %v1311 = vadd.f32 %v1309, %v1310
      %v1312 = vsel %vm848, %v1215, 0.0
      %v1313 = vadd.f32 %v1311, %v1312
      %v1314 = vsel %vm848, %v1216, 0.0
      %v1315 = vadd.f32 %v1313, %v1314
      %v1316 = vsel %vm848, %v1217, 0.0
      %v1317 = vadd.f32 %v1315, %v1316
      %v1318 = vsel %vm848, %v1218, 0.0
      %v1319 = vadd.f32 %v1317, %v1318
      %v1320 = vsel %vm848, %v1219, 0.0
      %v1321 = vadd.f32 %v1319, %v1320
      %v1322 = vsel %vm848, %v1220, 0.0
      %v1323 = vadd.f32 %v1321, %v1322
      %v1324 = vsel %vm848, %v1221, 0.0
      %v1325 = vadd.f32 %v1323, %v1324
      %v1326 = vsel %vm848, %v1222, 0.0
      %v1327 = vadd.f32 %v1325, %v1326
      %v1328 = vsel %vm848, %v1223, 0.0
      %v1329 = vadd.f32 %v1327, %v1328
      %v1330 = vsel %vm848, %v1224, 0.0
      %v1331 = vadd.f32 %v1329, %v1330
      %v1332 = vsel %vm848, %v1225, 0.0
      %v1333 = vadd.f32 %v1331, %v1332
      %v1334 = vsel %vm848, %v1226, 0.0
      %v1335 = vadd.f32 %v1333, %v1334
      %v1336 = vsel %vm848, %v1227, 0.0
      %v1337 = vadd.f32 %v1335, %v1336
      %v1338 = vsel %vm848, %v1228, 0.0
      %v1339 = vadd.f32 %v1337, %v1338
      %v1340 = vsel %vm848, %v1229, 0.0
      %v1341 = vadd.f32 %v1339, %v1340
      %v1342 = vsel %vm848, %v1230, 0.0
      %v1343 = vadd.f32 %v1341, %v1342
      %v1344 = vsel %vm848, %v1231, 0.0
      %v1345 = vadd.f32 %v1343, %v1344
      %v1346 = vsel %vm848, %v1232, 0.0
      %v1347 = vadd.f32 %v1345, %v1346
      %v1348 = vsel %vm848, %v1233, 0.0
      %v1349 = vadd.f32 %v1347, %v1348
      %v1350 = vsel %vm848, %v1234, 0.0
      %v1351 = vadd.f32 %v1349, %v1350
      %v1352 = vsel %vm848, %v1235, 0.0
      %v1353 = vadd.f32 %v1351, %v1352
      %v1354 = vsel %vm848, %v1236, 0.0
      %v1355 = vadd.f32 %v1353, %v1354
      %v1356 = vsel %vm848, %v1237, 0.0
      %v1357 = vadd.f32 %v1355, %v1356
      %v1358 = vsel %vm848, %v1238, 0.0
      %v1359 = vadd.f32 %v1357, %v1358
      %v1360 = vsel %vm848, %v1239, 0.0
      %v1361 = vadd.f32 %v1359, %v1360
      %v1362 = vsel %vm848, %v1240, 0.0
      %v1363 = vadd.f32 %v1361, %v1362
      %v1364 = vsel %vm848, %v1241, 0.0
      %v1365 = vadd.f32 %v1363, %v1364
      %v1366 = vsel %vm848, %v1242, 0.0
      %v1367 = vadd.f32 %v1365, %v1366
      %v1368 = vsel %vm848, %v1243, 0.0
      %v1369 = vadd.f32 %v1367, %v1368
      %v1370 = vsel %vm848, %v1244, 0.0
      %v1371 = vadd.f32 %v1369, %v1370
      %v1372 = vrot.slane %v1371, 4
      %v1373 = vadd.f32 %v1371, %v1372
      %v1374 = vrot.slane %v1373, 2
      %v1375 = vadd.f32 %v1373, %v1374
      %v1376 = vrot.slane %v1375, 1
      %v1377 = vadd.f32 %v1375, %v1376
      %v1378 = vmul.f32 %v1377, %v1115
      %v1379 = vadd.f32 %v1378, 1e-05
      %v1380 = vrsqrt.pop %v1379
      %v1381 = vmul.f32 %v1117, %v1380
      %v1382 = vmul.f32 %v1118, %v1380
      %v1383 = vmul.f32 %v1119, %v1380
      %v1384 = vmul.f32 %v1120, %v1380
      %v1385 = vmul.f32 %v1121, %v1380
      %v1386 = vmul.f32 %v1122, %v1380
      %v1387 = vmul.f32 %v1123, %v1380
      %v1388 = vmul.f32 %v1124, %v1380
      %v1389 = vmul.f32 %v1125, %v1380
      %v1390 = vmul.f32 %v1126, %v1380
      %v1391 = vmul.f32 %v1127, %v1380
      %v1392 = vmul.f32 %v1128, %v1380
      %v1393 = vmul.f32 %v1129, %v1380
      %v1394 = vmul.f32 %v1130, %v1380
      %v1395 = vmul.f32 %v1131, %v1380
      %v1396 = vmul.f32 %v1132, %v1380
      %v1397 = vmul.f32 %v1133, %v1380
      %v1398 = vmul.f32 %v1134, %v1380
      %v1399 = vmul.f32 %v1135, %v1380
      %v1400 = vmul.f32 %v1136, %v1380
      %v1401 = vmul.f32 %v1137, %v1380
      %v1402 = vmul.f32 %v1138, %v1380
      %v1403 = vmul.f32 %v1139, %v1380
      %v1404 = vmul.f32 %v1140, %v1380
      %v1405 = vmul.f32 %v1141, %v1380
      %v1406 = vmul.f32 %v1142, %v1380
      %v1407 = vmul.f32 %v1143, %v1380
      %v1408 = vmul.f32 %v1144, %v1380
      %v1409 = vmul.f32 %v1145, %v1380
      %v1410 = vmul.f32 %v1146, %v1380
      %v1411 = vmul.f32 %v1147, %v1380
      %v1412 = vmul.f32 %v1148, %v1380
      %v1413 = vmul.f32 %v1149, %v1380
      %v1414 = vmul.f32 %v1150, %v1380
      %v1415 = vmul.f32 %v1151, %v1380
      %v1416 = vmul.f32 %v1152, %v1380
      %v1417 = vmul.f32 %v1153, %v1380
      %v1418 = vmul.f32 %v1154, %v1380
      %v1419 = vmul.f32 %v1155, %v1380
      %v1420 = vmul.f32 %v1156, %v1380
      %v1421 = vmul.f32 %v1157, %v1380
      %v1422 = vmul.f32 %v1158, %v1380
      %v1423 = vmul.f32 %v1159, %v1380
      %v1424 = vmul.f32 %v1160, %v1380
      %v1425 = vmul.f32 %v1161, %v1380
      %v1426 = vmul.f32 %v1162, %v1380
      %v1427 = vmul.f32 %v1163, %v1380
      %v1428 = vmul.f32 %v1164, %v1380
      %v1429 = vmul.f32 %v1165, %v1380
      %v1430 = vmul.f32 %v1166, %v1380
      %v1431 = vmul.f32 %v1167, %v1380
      %v1432 = vmul.f32 %v1168, %v1380
      %v1433 = vmul.f32 %v1169, %v1380
      %v1434 = vmul.f32 %v1170, %v1380
      %v1435 = vmul.f32 %v1171, %v1380
      %v1436 = vmul.f32 %v1172, %v1380
      %v1437 = vmul.f32 %v1173, %v1380
      %v1438 = vmul.f32 %v1174, %v1380
      %v1439 = vmul.f32 %v1175, %v1380
      %v1440 = vmul.f32 %v1176, %v1380
      %v1441 = vmul.f32 %v1177, %v1380
      %v1442 = vmul.f32 %v1178, %v1380
      %v1443 = vmul.f32 %v1179, %v1380
      %v1444 = vmul.f32 %v1180, %v1380
      %v1446 = vlaneseq
      %v1447 = vshrl.u32 %v1446, 7
      %v1448 = vsub.s32 0, %v1447
      %v1449 = vrot.slane %v980, %v1448
      %v1451 = vmul.f32 %v1381, %v1449
      %v1452 = vmul.f32 %v1382, %v1449
      %v1453 = vmul.f32 %v1383, %v1449
      %v1454 = vmul.f32 %v1384, %v1449
      %v1455 = vmul.f32 %v1385, %v1449
      %v1456 = vmul.f32 %v1386, %v1449
      %v1457 = vmul.f32 %v1387, %v1449
      %v1458 = vmul.f32 %v1388, %v1449
      %v1459 = vmul.f32 %v1389, %v1449
      %v1460 = vmul.f32 %v1390, %v1449
      %v1461 = vmul.f32 %v1391, %v1449
      %v1462 = vmul.f32 %v1392, %v1449
      %v1463 = vmul.f32 %v1393, %v1449
      %v1464 = vmul.f32 %v1394, %v1449
      %v1465 = vmul.f32 %v1395, %v1449
      %v1466 = vmul.f32 %v1396, %v1449
      %v1467 = vmul.f32 %v1397, %v1449
      %v1468 = vmul.f32 %v1398, %v1449
      %v1469 = vmul.f32 %v1399, %v1449
      %v1470 = vmul.f32 %v1400, %v1449
      %v1471 = vmul.f32 %v1401, %v1449
      %v1472 = vmul.f32 %v1402, %v1449
      %v1473 = vmul.f32 %v1403, %v1449
      %v1474 = vmul.f32 %v1404, %v1449
      %v1475 = vmul.f32 %v1405, %v1449
      %v1476 = vmul.f32 %v1406, %v1449
      %v1477 = vmul.f32 %v1407, %v1449
      %v1478 = vmul.f32 %v1408, %v1449
      %v1479 = vmul.f32 %v1409, %v1449
      %v1480 = vmul.f32 %v1410, %v1449
      %v1481 = vmul.f32 %v1411, %v1449
      %v1482 = vmul.f32 %v1412, %v1449
      %v1483 = vmul.f32 %v1413, %v1449
      %v1484 = vmul.f32 %v1414, %v1449
      %v1485 = vmul.f32 %v1415, %v1449
      %v1486 = vmul.f32 %v1416, %v1449
      %v1487 = vmul.f32 %v1417, %v1449
      %v1488 = vmul.f32 %v1418, %v1449
      %v1489 = vmul.f32 %v1419, %v1449
      %v1490 = vmul.f32 %v1420, %v1449
      %v1491 = vmul.f32 %v1421, %v1449
      %v1492 = vmul.f32 %v1422, %v1449
      %v1493 = vmul.f32 %v1423, %v1449
      %v1494 = vmul.f32 %v1424, %v1449
      %v1495 = vmul.f32 %v1425, %v1449
      %v1496 = vmul.f32 %v1426, %v1449
      %v1497 = vmul.f32 %v1427, %v1449
      %v1498 = vmul.f32 %v1428, %v1449
      %v1499 = vmul.f32 %v1429, %v1449
      %v1500 = vmul.f32 %v1430, %v1449
      %v1501 = vmul.f32 %v1431, %v1449
      %v1502 = vmul.f32 %v1432, %v1449
      %v1503 = vmul.f32 %v1433, %v1449
      %v1504 = vmul.f32 %v1434, %v1449
      %v1505 = vmul.f32 %v1435, %v1449
      %v1506 = vmul.f32 %v1436, %v1449
      %v1507 = vmul.f32 %v1437, %v1449
      %v1508 = vmul.f32 %v1438, %v1449
      %v1509 = vmul.f32 %v1439, %v1449
      %v1510 = vmul.f32 %v1440, %v1449
      %v1511 = vmul.f32 %v1441, %v1449
      %v1512 = vmul.f32 %v1442, %v1449
      %v1513 = vmul.f32 %v1443, %v1449
      %v1514 = vmul.f32 %v1444, %v1449
      %v1516 = vlaneseq
      %v1517 = vshrl.u32 %v1516, 7
      %v1518 = vsub.s32 0, %v1517
      %v1519 = vrot.slane %v981, %v1518
      %v1521 = vadd.f32 %v1451, %v1519
      %v1522 = vadd.f32 %v1452, %v1519
      %v1523 = vadd.f32 %v1453, %v1519
      %v1524 = vadd.f32 %v1454, %v1519
      %v1525 = vadd.f32 %v1455, %v1519
      %v1526 = vadd.f32 %v1456, %v1519
      %v1527 = vadd.f32 %v1457, %v1519
      %v1528 = vadd.f32 %v1458, %v1519
      %v1529 = vadd.f32 %v1459, %v1519
      %v1530 = vadd.f32 %v1460, %v1519
      %v1531 = vadd.f32 %v1461, %v1519
      %v1532 = vadd.f32 %v1462, %v1519
      %v1533 = vadd.f32 %v1463, %v1519
      %v1534 = vadd.f32 %v1464, %v1519
      %v1535 = vadd.f32 %v1465, %v1519
      %v1536 = vadd.f32 %v1466, %v1519
      %v1537 = vadd.f32 %v1467, %v1519
      %v1538 = vadd.f32 %v1468, %v1519
      %v1539 = vadd.f32 %v1469, %v1519
      %v1540 = vadd.f32 %v1470, %v1519
      %v1541 = vadd.f32 %v1471, %v1519
      %v1542 = vadd.f32 %v1472, %v1519
      %v1543 = vadd.f32 %v1473, %v1519
      %v1544 = vadd.f32 %v1474, %v1519
      %v1545 = vadd.f32 %v1475, %v1519
      %v1546 = vadd.f32 %v1476, %v1519
      %v1547 = vadd.f32 %v1477, %v1519
      %v1548 = vadd.f32 %v1478, %v1519
      %v1549 = vadd.f32 %v1479, %v1519
      %v1550 = vadd.f32 %v1480, %v1519
      %v1551 = vadd.f32 %v1481, %v1519
      %v1552 = vadd.f32 %v1482, %v1519
      %v1553 = vadd.f32 %v1483, %v1519
      %v1554 = vadd.f32 %v1484, %v1519
      %v1555 = vadd.f32 %v1485, %v1519
      %v1556 = vadd.f32 %v1486, %v1519
      %v1557 = vadd.f32 %v1487, %v1519
      %v1558 = vadd.f32 %v1488, %v1519
      %v1559 = vadd.f32 %v1489, %v1519
      %v1560 = vadd.f32 %v1490, %v1519
      %v1561 = vadd.f32 %v1491, %v1519
      %v1562 = vadd.f32 %v1492, %v1519
      %v1563 = vadd.f32 %v1493, %v1519
      %v1564 = vadd.f32 %v1494, %v1519
      %v1565 = vadd.f32 %v1495, %v1519
      %v1566 = vadd.f32 %v1496, %v1519
      %v1567 = vadd.f32 %v1497, %v1519
      %v1568 = vadd.f32 %v1498, %v1519
      %v1569 = vadd.f32 %v1499, %v1519
      %v1570 = vadd.f32 %v1500, %v1519
      %v1571 = vadd.f32 %v1501, %v1519
      %v1572 = vadd.f32 %v1502, %v1519
      %v1573 = vadd.f32 %v1503, %v1519
      %v1574 = vadd.f32 %v1504, %v1519
      %v1575 = vadd.f32 %v1505, %v1519
      %v1576 = vadd.f32 %v1506, %v1519
      %v1577 = vadd.f32 %v1507, %v1519
      %v1578 = vadd.f32 %v1508, %v1519
      %v1579 = vadd.f32 %v1509, %v1519
      %v1580 = vadd.f32 %v1510, %v1519
      %v1581 = vadd.f32 %v1511, %v1519
      %v1582 = vadd.f32 %v1512, %v1519
      %v1583 = vadd.f32 %v1513, %v1519
      %v1584 = vadd.f32 %v1514, %v1519
      %v1585 = vmax.f32 %v1521, 0.0
      %v1586 = vmax.f32 %v1522, 0.0
      %v1587 = vmax.f32 %v1523, 0.0
      %v1588 = vmax.f32 %v1524, 0.0
      %v1589 = vmax.f32 %v1525, 0.0
      %v1590 = vmax.f32 %v1526, 0.0
      %v1591 = vmax.f32 %v1527, 0.0
      %v1592 = vmax.f32 %v1528, 0.0
      %v1593 = vmax.f32 %v1529, 0.0
      %v1594 = vmax.f32 %v1530, 0.0
      %v1595 = vmax.f32 %v1531, 0.0
      %v1596 = vmax.f32 %v1532, 0.0
      %v1597 = vmax.f32 %v1533, 0.0
      %v1598 = vmax.f32 %v1534, 0.0
      %v1599 = vmax.f32 %v1535, 0.0
      %v1600 = vmax.f32 %v1536, 0.0
      %v1601 = vmax.f32 %v1537, 0.0
      %v1602 = vmax.f32 %v1538, 0.0
      %v1603 = vmax.f32 %v1539, 0.0
      %v1604 = vmax.f32 %v1540, 0.0
      %v1605 = vmax.f32 %v1541, 0.0
      %v1606 = vmax.f32 %v1542, 0.0
      %v1607 = vmax.f32 %v1543, 0.0
      %v1608 = vmax.f32 %v1544, 0.0
      %v1609 = vmax.f32 %v1545, 0.0
      %v1610 = vmax.f32 %v1546, 0.0
      %v1611 = vmax.f32 %v1547, 0.0
      %v1612 = vmax.f32 %v1548, 0.0
      %v1613 = vmax.f32 %v1549, 0.0
      %v1614 = vmax.f32 %v1550, 0.0
      %v1615 = vmax.f32 %v1551, 0.0
      %v1616 = vmax.f32 %v1552, 0.0
      %v1617 = vmax.f32 %v1553, 0.0
      %v1618 = vmax.f32 %v1554, 0.0
      %v1619 = vmax.f32 %v1555, 0.0
      %v1620 = vmax.f32 %v1556, 0.0
      %v1621 = vmax.f32 %v1557, 0.0
      %v1622 = vmax.f32 %v1558, 0.0
      %v1623 = vmax.f32 %v1559, 0.0
      %v1624 = vmax.f32 %v1560, 0.0
      %v1625 = vmax.f32 %v1561, 0.0
      %v1626 = vmax.f32 %v1562, 0.0
      %v1627 = vmax.f32 %v1563, 0.0
      %v1628 = vmax.f32 %v1564, 0.0
      %v1629 = vmax.f32 %v1565, 0.0
      %v1630 = vmax.f32 %v1566, 0.0
      %v1631 = vmax.f32 %v1567, 0.0
      %v1632 = vmax.f32 %v1568, 0.0
      %v1633 = vmax.f32 %v1569, 0.0
      %v1634 = vmax.f32 %v1570, 0.0
      %v1635 = vmax.f32 %v1571, 0.0
      %v1636 = vmax.f32 %v1572, 0.0
      %v1637 = vmax.f32 %v1573, 0.0
      %v1638 = vmax.f32 %v1574, 0.0
      %v1639 = vmax.f32 %v1575, 0.0
      %v1640 = vmax.f32 %v1576, 0.0
      %v1641 = vmax.f32 %v1577, 0.0
      %v1642 = vmax.f32 %v1578, 0.0
      %v1643 = vmax.f32 %v1579, 0.0
      %v1644 = vmax.f32 %v1580, 0.0
      %v1645 = vmax.f32 %v1581, 0.0
      %v1646 = vmax.f32 %v1582, 0.0
      %v1647 = vmax.f32 %v1583, 0.0
      %v1648 = vmax.f32 %v1584, 0.0
      %1649 = vst.msk [vmem:[#allocation3] sm:$0xff] %vm848, %v1585
      %1650 = vst.msk [vmem:[#allocation3 + $0x8] sm:$0xff] %vm848, %v1586
      %1651 = vst.msk [vmem:[#allocation3 + $0x10] sm:$0xff] %vm848, %v1587
      %1652 = vst.msk [vmem:[#allocation3 + $0x18] sm:$0xff] %vm848, %v1588
      %1653 = vst.msk [vmem:[#allocation3 + $0x20] sm:$0xff] %vm848, %v1589
      %1654 = vst.msk [vmem:[#allocation3 + $0x28] sm:$0xff] %vm848, %v1590
      %1655 = vst.msk [vmem:[#allocation3 + $0x30] sm:$0xff] %vm848, %v1591
      %1656 = vst.msk [vmem:[#allocation3 + $0x38] sm:$0xff] %vm848, %v1592
      %1657 = vst.msk [vmem:[#allocation3 + $0x40] sm:$0xff] %vm848, %v1593
      %1658 = vst.msk [vmem:[#allocation3 + $0x48] sm:$0xff] %vm848, %v1594
      %1659 = vst.msk [vmem:[#allocation3 + $0x50] sm:$0xff] %vm848, %v1595
      %1660 = vst.msk [vmem:[#allocation3 + $0x58] sm:$0xff] %vm848, %v1596
      %1661 = vst.msk [vmem:[#allocation3 + $0x60] sm:$0xff] %vm848, %v1597
      %1662 = vst.msk [vmem:[#allocation3 + $0x68] sm:$0xff] %vm848, %v1598
      %1663 = vst.msk [vmem:[#allocation3 + $0x70] sm:$0xff] %vm848, %v1599
      %1664 = vst.msk [vmem:[#allocation3 + $0x78] sm:$0xff] %vm848, %v1600
      %1665 = vst.msk [vmem:[#allocation3 + $0x80] sm:$0xff] %vm848, %v1601
      %1666 = vst.msk [vmem:[#allocation3 + $0x88] sm:$0xff] %vm848, %v1602
      %1667 = vst.msk [vmem:[#allocation3 + $0x90] sm:$0xff] %vm848, %v1603
      %1668 = vst.msk [vmem:[#allocation3 + $0x98] sm:$0xff] %vm848, %v1604
      %1669 = vst.msk [vmem:[#allocation3 + $0xa0] sm:$0xff] %vm848, %v1605
      %1670 = vst.msk [vmem:[#allocation3 + $0xa8] sm:$0xff] %vm848, %v1606
      %1671 = vst.msk [vmem:[#allocation3 + $0xb0] sm:$0xff] %vm848, %v1607
      %1672 = vst.msk [vmem:[#allocation3 + $0xb8] sm:$0xff] %vm848, %v1608
      %1673 = vst.msk [vmem:[#allocation3 + $0xc0] sm:$0xff] %vm848, %v1609
      %1674 = vst.msk [vmem:[#allocation3 + $0xc8] sm:$0xff] %vm848, %v1610
      %1675 = vst.msk [vmem:[#allocation3 + $0xd0] sm:$0xff] %vm848, %v1611
      %1676 = vst.msk [vmem:[#allocation3 + $0xd8] sm:$0xff] %vm848, %v1612
      %1677 = vst.msk [vmem:[#allocation3 + $0xe0] sm:$0xff] %vm848, %v1613
      %1678 = vst.msk [vmem:[#allocation3 + $0xe8] sm:$0xff] %vm848, %v1614
      %1679 = vst.msk [vmem:[#allocation3 + $0xf0] sm:$0xff] %vm848, %v1615
      %1680 = vst.msk [vmem:[#allocation3 + $0xf8] sm:$0xff] %vm848, %v1616
      %1681 = vst.msk [vmem:[#allocation3 + $0x100] sm:$0xff] %vm848, %v1617
      %1682 = vst.msk [vmem:[#allocation3 + $0x108] sm:$0xff] %vm848, %v1618
      %1683 = vst.msk [vmem:[#allocation3 + $0x110] sm:$0xff] %vm848, %v1619
      %1684 = vst.msk [vmem:[#allocation3 + $0x118] sm:$0xff] %vm848, %v1620
      %1685 = vst.msk [vmem:[#allocation3 + $0x120] sm:$0xff] %vm848, %v1621
      %1686 = vst.msk [vmem:[#allocation3 + $0x128] sm:$0xff] %vm848, %v1622
      %1687 = vst.msk [vmem:[#allocation3 + $0x130] sm:$0xff] %vm848, %v1623
      %1688 = vst.msk [vmem:[#allocation3 + $0x138] sm:$0xff] %vm848, %v1624
      %1689 = vst.msk [vmem:[#allocation3 + $0x140] sm:$0xff] %vm848, %v1625
      %1690 = vst.msk [vmem:[#allocation3 + $0x148] sm:$0xff] %vm848, %v1626
      %1691 = vst.msk [vmem:[#allocation3 + $0x150] sm:$0xff] %vm848, %v1627
      %1692 = vst.msk [vmem:[#allocation3 + $0x158] sm:$0xff] %vm848, %v1628
      %1693 = vst.msk [vmem:[#allocation3 + $0x160] sm:$0xff] %vm848, %v1629
      %1694 = vst.msk [vmem:[#allocation3 + $0x168] sm:$0xff] %vm848, %v1630
      %1695 = vst.msk [vmem:[#allocation3 + $0x170] sm:$0xff] %vm848, %v1631
      %1696 = vst.msk [vmem:[#allocation3 + $0x178] sm:$0xff] %vm848, %v1632
      %1697 = vst.msk [vmem:[#allocation3 + $0x180] sm:$0xff] %vm848, %v1633
      %1698 = vst.msk [vmem:[#allocation3 + $0x188] sm:$0xff] %vm848, %v1634
      %1699 = vst.msk [vmem:[#allocation3 + $0x190] sm:$0xff] %vm848, %v1635
      %1700 = vst.msk [vmem:[#allocation3 + $0x198] sm:$0xff] %vm848, %v1636
      %1701 = vst.msk [vmem:[#allocation3 + $0x1a0] sm:$0xff] %vm848, %v1637
      %1702 = vst.msk [vmem:[#allocation3 + $0x1a8] sm:$0xff] %vm848, %v1638
      %1703 = vst.msk [vmem:[#allocation3 + $0x1b0] sm:$0xff] %vm848, %v1639
      %1704 = vst.msk [vmem:[#allocation3 + $0x1b8] sm:$0xff] %vm848, %v1640
      %1705 = vst.msk [vmem:[#allocation3 + $0x1c0] sm:$0xff] %vm848, %v1641
      %1706 = vst.msk [vmem:[#allocation3 + $0x1c8] sm:$0xff] %vm848, %v1642
      %1707 = vst.msk [vmem:[#allocation3 + $0x1d0] sm:$0xff] %vm848, %v1643
      %1708 = vst.msk [vmem:[#allocation3 + $0x1d8] sm:$0xff] %vm848, %v1644
      %1709 = vst.msk [vmem:[#allocation3 + $0x1e0] sm:$0xff] %vm848, %v1645
      %1710 = vst.msk [vmem:[#allocation3 + $0x1e8] sm:$0xff] %vm848, %v1646
      %1711 = vst.msk [vmem:[#allocation3 + $0x1f0] sm:$0xff] %vm848, %v1647
      %1712 = vst.msk [vmem:[#allocation3 + $0x1f8] sm:$0xff] %vm848, %v1648
    $region25: #{_conv_slab_nores.1} parent=1 // pred_fallthru
      _
    // Predicated region
    $region26: #{_conv_slab_nores.1} parent=1 // pred_check
      _
    $region27: #{_conv_slab_nores.1} parent=1 // pred_check_branch
      %1714 = sbr.rel (0) target = $region29
    $region28: #{_conv_slab_nores.1} parent=1 // pred_region
      %s1716 = ssub.s32 8192, 8192
      %1717 = vsyncadd [#allocation4], %s1716
      %s1718 = sshll.u32 [#allocation3], 4
      %s1719 = int_to_ptr.vmem [resolvable:$true] %s1718
      %1724 = dma.vmem_to_hbm [thread:$0]  %s1719, 8192, %s4, [#allocation4], 128, 128, 8
    $region29: #{_conv_slab_nores.1} parent=1 // pred_fallthru
      _
    // Predicated region
    $region30: #{_conv_slab_nores.1} parent=1 // pred_check
      _
    $region31: #{_conv_slab_nores.1} parent=1 // pred_check_branch
      %1726 = sbr.rel (0) target = $region33
    $region32: #{_conv_slab_nores.1} parent=1 // pred_region
      %1727 = dma.done [#allocation4], 8192
    $region33: #{_conv_slab_nores.1} parent=1 // pred_fallthru
      _
    %1728 = vsyncpa [#allocation4], 1

</llo_original>
